<compile_context>
chip_gen: v7x
topology: tpu7x:2x2x1
jax: 0.10.0
libtpu: 0.0.40
codegen_flags: <defaults>
</compile_context>

<pallas_src>
import functools

import jax
import jax.numpy as jnp
from jax.experimental import pallas as pl
from jax.experimental.pallas import tpu as pltpu


# ------------------------------ Pallas kernel ------------------------------ #

def _sepconv_kernel(x_ref, wrow1_ref, pw1_ref, b1_ref, wrow2_ref, pw2_ref,
                    b2_ref, o_ref, xp1_ref, xp2_ref, *,
                    nb, c_in, c_out, k, stride, pad,
                    h, w, h1, w1, h2, w2, wp1, wp2):
    """Fused SepConv forward for `nb` batch elements (channel-packed lanes).

    x_ref:     (nb, c_in, h, w)              input tile (NCHW)
    wrow*_ref: (k*k, c_in*wp)        VMEM    per-lane depthwise weight rows
    pw*_ref:   (c_in*n_out,)         SMEM    1x1 weights (BN scale folded), flat
    b*_ref:    (n_out,)              SMEM    folded BN bias
    o_ref:     (nb, h2, c_out*w2)            lane-dense packed output tile
    xp1_ref:   (hp1, c_in*wp1 + k-1) VMEM    padded stage-1 input, channel-packed
    xp2_ref:   (hp2, c_in*wp2 + k-1) VMEM    padded stage-2 input, channel-packed
    """
    f32 = jnp.float32
    L1 = c_in * wp1            # valid packed lane width, stage 1
    L2 = c_in * wp2            # valid packed lane width, stage 2

    # Zero both padded scratch buffers (halo + slack lanes) once per grid step.
    # NOTE: must run on EVERY step -- under "parallel" megacore semantics each
    # TensorCore owns a private scratch and only one core sees step 0.  At this
    # size the full zero is only a few vreg stores per stage.
    xp1_ref[...] = jnp.zeros_like(xp1_ref)
    xp2_ref[...] = jnp.zeros_like(xp2_ref)

    wr1 = wrow1_ref[...]       # (k*k, L1), loaded once per step
    wr2 = wrow2_ref[...]       # (k*k, L2)

    def depthwise_packed(xv, wr, hout, L, s):
        """k x k depthwise conv on the channel-packed plane.

        One wide MAC per (dy, dx) tap covering ALL channels at once; the tap
        windows are static slices of the already-loaded value (vreg shifts).
        """
        acc = None
        for dy in range(k):
            for dx in range(k):
                t = dy * k + dx
                if s == 1:
                    tap = jax.lax.slice(xv, (dy, dx), (dy + hout, dx + L))
                else:
                    # TODO(synk): stride>1 keeps lanes unit-strided here and
                    # subsamples lanes later in extract_channel(); this branch
                    # is not exercised by the stride=1 test below.
                    tap = jax.lax.slice(xv, (dy, dx),
                                        (dy + (hout - 1) * s + 1, dx + L),
                                        (s, 1))
                term = tap * wr[t:t + 1, :]
                acc = term if acc is None else acc + term
        return acc             # (hout, L)

    def extract_channel(acc, ci, seg_w, wout, s):
        """Per-channel (hout, wout) window out of the packed accumulator."""
        base = ci * seg_w
        if s == 1:
            return acc[:, base:base + wout]
        return jax.lax.slice(acc, (0, base),
                             (acc.shape[0], base + (wout - 1) * s + 1), (1, s))

    for b in range(nb):
        # ---- stage 1: ReLU -> pad (packed VMEM) -> depthwise -> 1x1 + BN ---- #
        for c in range(c_in):
            xp1_ref[pad:pad + h, c * wp1 + pad:c * wp1 + pad + w] = (
                jnp.maximum(x_ref[b, c].astype(f32), 0.0))

        xv1 = xp1_ref[...]                     # single load of the padded plane
        acc1 = depthwise_packed(xv1, wr1, h1, L1, stride)
        a1 = [extract_channel(acc1, ci, wp1, w1, stride) for ci in range(c_in)]

        for co in range(c_in):                 # stage-1 pointwise is c_in->c_in
            z = a1[0] * pw1_ref[co]
            for ci in range(1, c_in):
                z = z + a1[ci] * pw1_ref[ci * c_in + co]
            z = jnp.maximum(z + b1_ref[co], 0.0)   # folded BN bias + next ReLU
            xp2_ref[pad:pad + h1, co * wp2 + pad:co * wp2 + pad + w1] = z

        # ---- stage 2: depthwise (stride 1) -> 1x1 + BN -> lane-dense store -- #
        xv2 = xp2_ref[...]
        acc2 = depthwise_packed(xv2, wr2, h2, L2, 1)
        a2 = [extract_channel(acc2, ci, wp2, w2, 1) for ci in range(c_in)]

        for co in range(c_out):
            z = a2[0] * pw2_ref[co]
            for ci in range(1, c_in):
                z = z + a2[ci] * pw2_ref[ci * c_out + co]
            z = z + b2_ref[co]
            # Store each output channel as soon as it is ready; o_ref's last
            # dim is c_out*w2 (=128) lanes so the writeback DMA is lane-dense.
            o_ref[b, :, co * w2:(co + 1) * w2] = z.astype(o_ref.dtype)


# ------------------------------ glue / params ------------------------------ #

def d4_symmetrize(wk):
    """Average a (k, k, C) spatial kernel over the 8 dihedral-group transforms."""
    ws = [wk,
          jnp.rot90(wk, 1, axes=(0, 1)),
          jnp.rot90(wk, 2, axes=(0, 1)),
          jnp.rot90(wk, 3, axes=(0, 1))]
    wt = jnp.swapaxes(wk, 0, 1)
    ws += [wt,
           jnp.rot90(wt, 1, axes=(0, 1)),
           jnp.rot90(wt, 2, axes=(0, 1)),
           jnp.rot90(wt, 3, axes=(0, 1))]
    return sum(ws) / 8.0


def _fold_bn(gamma, beta, mean, var, eps, skip):
    if skip:  # AdaptiveBatchNorm2d is identity when its input height == 1
        return jnp.ones_like(gamma), jnp.zeros_like(beta)
    scale = gamma / jnp.sqrt(var + eps)
    return scale, beta - mean * scale


def init_sepconv_params(key, c_in, c_out, kernel_size):
    ks = jax.random.split(key, 12)
    f32 = jnp.float32
    return dict(
        dw1=0.2 * jax.random.normal(ks[0], (kernel_size, kernel_size, c_in), f32),
        pw1=0.2 * jax.random.normal(ks[1], (c_in, c_in), f32),
        dw2=0.2 * jax.random.normal(ks[2], (kernel_size, kernel_size, c_in), f32),
        pw2=0.2 * jax.random.normal(ks[3], (c_in, c_out), f32),
        bn1_gamma=1.0 + 0.1 * jax.random.normal(ks[4], (c_in,), f32),
        bn1_beta=0.1 * jax.random.normal(ks[5], (c_in,), f32),
        bn1_mean=0.1 * jax.random.normal(ks[6], (c_in,), f32),
        bn1_var=0.5 + jnp.abs(jax.random.normal(ks[7], (c_in,), f32)),
        bn2_gamma=1.0 + 0.1 * jax.random.normal(ks[8], (c_out,), f32),
        bn2_beta=0.1 * jax.random.normal(ks[9], (c_out,), f32),
        bn2_mean=0.1 * jax.random.normal(ks[10], (c_out,), f32),
        bn2_var=0.5 + jnp.abs(jax.random.normal(ks[11], (c_out,), f32)),
    )


def sepconv_forward(params, x_nchw, *, kernel_size, stride, padding, eps=1e-5,
                    images_per_step=1):
    """SepConv forward (eval mode). x_nchw: (N, C_in, H, W) -> (N, C_out, H2, W2).

    images_per_step: batch elements folded into one grid step.  Keep 1 on v7x
    (2 TensorCores -> grid=(N,) parallel keeps both busy); use N on single-TC
    v5e/v6e to avoid per-step launch overhead.
    """
    n, c_in, h, w = x_nchw.shape
    k, s, pad = kernel_size, stride, padding
    assert s >= 1 and s <= k, "stride must be in [1, kernel_size]"
    assert n % images_per_step == 0
    nb = images_per_step

    hp1, wp1 = h + 2 * pad, w + 2 * pad
    h1, w1 = (hp1 - k) // s + 1, (wp1 - k) // s + 1
    hp2, wp2 = h1 + 2 * pad, w1 + 2 * pad
    h2, w2 = hp2 - k + 1, wp2 - k + 1
    c_out = params["pw2"].shape[1]

    dw1 = d4_symmetrize(params["dw1"])    # (k, k, c_in)
    dw2 = d4_symmetrize(params["dw2"])
    s1, b1 = _fold_bn(params["bn1_gamma"], params["bn1_beta"],
                      params["bn1_mean"], params["bn1_var"], eps, skip=(h1 == 1))
    s2, b2 = _fold_bn(params["bn2_gamma"], params["bn2_beta"],
                      params["bn2_mean"], params["bn2_var"], eps, skip=(h2 == 1))
    # Fold the BN scale into the 1x1 weights (param-sized ops only).
    pw1 = (params["pw1"] * s1[None, :]).reshape(-1).astype(jnp.float32)
    pw2 = (params["pw2"] * s2[None, :]).reshape(-1).astype(jnp.float32)

    # Per-lane depthwise weight rows for the channel-packed layout:
    #   wrow[t, c*wp + col] = dw[t//k, t%k, c]
    wrow1 = jnp.repeat(dw1.reshape(k * k, c_in), wp1, axis=1).astype(jnp.float32)
    wrow2 = jnp.repeat(dw2.reshape(k * k, c_in), wp2, axis=1).astype(jnp.float32)

    # Padded, channel-packed scratch planes (+ k-1 slack lanes so the tap
    # slices never run off the end of the buffer).
    lp1 = c_in * wp1 + (k - 1)
    lp2 = c_in * wp2 + (k - 1)

    kernel = functools.partial(
        _sepconv_kernel, nb=nb, c_in=c_in, c_out=c_out, k=k, stride=s, pad=pad,
        h=h, w=w, h1=h1, w1=w1, h2=h2, w2=w2, wp1=wp1, wp2=wp2)

    smem_spec = pl.BlockSpec(memory_space=pltpu.MemorySpace.SMEM)
    out_packed = pl.pallas_call(
        kernel,
        out_shape=jax.ShapeDtypeStruct((n, h2, c_out * w2), x_nchw.dtype),
        grid=(n // nb,),
        in_specs=[
            pl.BlockSpec((nb, c_in, h, w), lambda i: (i, 0, 0, 0)),
            pl.BlockSpec((k * k, c_in * wp1), lambda i: (0, 0)),   # wrow1
            smem_spec, smem_spec,                                  # pw1, b1
            pl.BlockSpec((k * k, c_in * wp2), lambda i: (0, 0)),   # wrow2
            smem_spec, smem_spec,                                  # pw2, b2
        ],
        out_specs=pl.BlockSpec((nb, h2, c_out * w2), lambda i: (i, 0, 0)),
        scratch_shapes=[
            pltpu.VMEM((hp1, lp1), jnp.float32),
            pltpu.VMEM((hp2, lp2), jnp.float32),
        ],
        compiler_params=pltpu.CompilerParams(
            dimension_semantics=("parallel",)),
    )(x_nchw, wrow1, pw1, b1.astype(jnp.float32),
      wrow2, pw2, b2.astype(jnp.float32))

    # Lane-dense (N, H2, C_out*W2) -> NCHW; few-KiB wrapper-side transpose.
    return out_packed.reshape(n, h2, c_out, w2).transpose(0, 2, 1, 3)


# -------------------------------- reference -------------------------------- #

def _ref_stage(x, dw, pw, scale, bias, *, stride, padding):
    x = jnp.maximum(x, 0.0)
    cin = x.shape[1]
    dw_oihw = jnp.transpose(dw, (2, 0, 1))[:, None, :, :]  # (Cin,1,k,k)
    y = jax.lax.conv_general_dilated(
        x, dw_oihw, window_strides=(stride, stride),
        padding=[(padding, padding), (padding, padding)],
        feature_group_count=cin,
        dimension_numbers=("NCHW", "OIHW", "NCHW"))
    pw_oihw = jnp.transpose(pw, (1, 0))[:, :, None, None]  # (Cout,Cin,1,1)
    y = jax.lax.conv_general_dilated(
        y, pw_oihw, window_strides=(1, 1), padding="VALID",
        dimension_numbers=("NCHW", "OIHW", "NCHW"))
    return y * scale[None, :, None, None] + bias[None, :, None, None]


def sepconv_reference(params, x_nchw, *, kernel_size, stride, padding, eps=1e-5):
    k = kernel_size
    h = x_nchw.shape[2]
    h1 = (h + 2 * padding - k) // stride + 1
    h2 = (h1 + 2 * padding - k) + 1
    s1, b1 = _fold_bn(params["bn1_gamma"], params["bn1_beta"],
                      params["bn1_mean"], params["bn1_var"], eps, skip=(h1 == 1))
    s2, b2 = _fold_bn(params["bn2_gamma"], params["bn2_beta"],
                      params["bn2_mean"], params["bn2_var"], eps, skip=(h2 == 1))
    y = _ref_stage(x_nchw, d4_symmetrize(params["dw1"]), params["pw1"], s1, b1,
                   stride=stride, padding=padding)
    y = _ref_stage(y, d4_symmetrize(params["dw2"]), params["pw2"], s2, b2,
                   stride=1, padding=padding)
    return y


# ----------------------------------- main ---------------------------------- #

if __name__ == "__main__":
    C_IN, C_OUT, KSIZE, STRIDE, PAD = 4, 8, 3, 1, 1
    N, H, W = 2, 16, 16

    key = jax.random.PRNGKey(0)
    kx, kp = jax.random.split(key)
    x = jax.random.normal(kx, (N, C_IN, H, W), jnp.float32)
    params = init_sepconv_params(kp, C_IN, C_OUT, KSIZE)

    fwd = jax.jit(functools.partial(sepconv_forward, kernel_size=KSIZE,
                                    stride=STRIDE, padding=PAD))
    out = jax.block_until_ready(fwd(params, x))

    ref = jax.block_until_ready(
        sepconv_reference(params, x, kernel_size=KSIZE, stride=STRIDE,
                          padding=PAD))

    assert out.shape == ref.shape, (out.shape, ref.shape)
    assert jnp.allclose(out, ref, rtol=1e-3, atol=1e-3), float(
        jnp.max(jnp.abs(out - ref)))

    print("KERNEL_OK")
</pallas_src>

<mosaic_0001>
module attributes {stable_mosaic.version = 11 : i64} {
  func.func @_sepconv_kernel(%arg0: i32, %arg1: memref<1x4x16x16xf32, #tpu.memory_space<vmem>>, %arg2: memref<9x72xf32, #tpu.memory_space<vmem>>, %arg3: memref<16xf32, #tpu.memory_space<smem>>, %arg4: memref<4xf32, #tpu.memory_space<smem>>, %arg5: memref<9x72xf32, #tpu.memory_space<vmem>>, %arg6: memref<32xf32, #tpu.memory_space<smem>>, %arg7: memref<8xf32, #tpu.memory_space<smem>>, %arg8: memref<1x16x128xf32, #tpu.memory_space<vmem>>, %arg9: memref<18x74xf32, #tpu.memory_space<vmem>>, %arg10: memref<18x74xf32, #tpu.memory_space<vmem>>) attributes {dimension_semantics = [#tpu.dimension_semantics<parallel>], iteration_bounds = array<i64: 2>, scalar_prefetch = 0 : i64, scratch_operands = 2 : i64, tpu.core_type = #tpu.core_type<tc>, window_params = [{transform_indices = @transform_0, window_bounds = array<i64: 1, 4, 16, 16>}, {pipeline_mode = #tpu.pipeline_mode<synchronous>, transform_indices = @transform_1, window_bounds = array<i64: 9, 72>}, {transform_indices = @transform_2, window_bounds = array<i64: 16>}, {transform_indices = @transform_3, window_bounds = array<i64: 4>}, {pipeline_mode = #tpu.pipeline_mode<synchronous>, transform_indices = @transform_4, window_bounds = array<i64: 9, 72>}, {transform_indices = @transform_5, window_bounds = array<i64: 32>}, {transform_indices = @transform_6, window_bounds = array<i64: 8>}, {transform_indices = @transform_7, window_bounds = array<i64: 1, 16, 128>}]} {
    %cst = arith.constant 0.000000e+00 : f32
    %0 = vector.broadcast %cst : f32 to vector<18x74xf32>
    %c0 = arith.constant 0 : index
    %c0_0 = arith.constant 0 : index
    %1 = vector.load %arg9[%c0, %c0_0] : memref<18x74xf32, #tpu.memory_space<vmem>>, vector<18x74xf32>
    tpu.vector_store %arg9[%c0, %c0_0], %0 {strides = array<i32>} : memref<18x74xf32, #tpu.memory_space<vmem>>, vector<18x74xf32>,
    %cst_1 = arith.constant 0.000000e+00 : f32
    %2 = vector.broadcast %cst_1 : f32 to vector<18x74xf32>
    %c0_2 = arith.constant 0 : index
    %c0_3 = arith.constant 0 : index
    %3 = vector.load %arg10[%c0_2, %c0_3] : memref<18x74xf32, #tpu.memory_space<vmem>>, vector<18x74xf32>
    tpu.vector_store %arg10[%c0_2, %c0_3], %2 {strides = array<i32>} : memref<18x74xf32, #tpu.memory_space<vmem>>, vector<18x74xf32>,
    %c0_4 = arith.constant 0 : index
    %c0_5 = arith.constant 0 : index
    %4 = vector.load %arg2[%c0_4, %c0_5] : memref<9x72xf32, #tpu.memory_space<vmem>>, vector<9x72xf32>
    %c0_6 = arith.constant 0 : index
    %c0_7 = arith.constant 0 : index
    %5 = vector.load %arg5[%c0_6, %c0_7] : memref<9x72xf32, #tpu.memory_space<vmem>>, vector<9x72xf32>
    %c0_8 = arith.constant 0 : index
    %c0_9 = arith.constant 0 : index
    %c0_10 = arith.constant 0 : index
    %c0_11 = arith.constant 0 : index
    %6 = vector.load %arg1[%c0_8, %c0_9, %c0_10, %c0_11] : memref<1x4x16x16xf32, #tpu.memory_space<vmem>>, vector<1x1x16x16xf32>
    %7 = vector.shape_cast %6 : vector<1x1x16x16xf32> to vector<16x16xf32>
    %cst_12 = arith.constant 0.000000e+00 : f32
    %8 = vector.broadcast %cst_12 : f32 to vector<16x16xf32>
    %9 = arith.maximumf %7, %8 : vector<16x16xf32>
    %c1 = arith.constant 1 : index
    %c1_13 = arith.constant 1 : index
    %10 = vector.load %arg9[%c1, %c1_13] : memref<18x74xf32, #tpu.memory_space<vmem>>, vector<16x16xf32>
    tpu.vector_store %arg9[%c1, %c1_13], %9 {strides = array<i32>} : memref<18x74xf32, #tpu.memory_space<vmem>>, vector<16x16xf32>,
    %c0_14 = arith.constant 0 : index
    %c1_15 = arith.constant 1 : index
    %c0_16 = arith.constant 0 : index
    %c0_17 = arith.constant 0 : index
    %11 = vector.load %arg1[%c0_14, %c1_15, %c0_16, %c0_17] : memref<1x4x16x16xf32, #tpu.memory_space<vmem>>, vector<1x1x16x16xf32>
    %12 = vector.shape_cast %11 : vector<1x1x16x16xf32> to vector<16x16xf32>
    %cst_18 = arith.constant 0.000000e+00 : f32
    %13 = vector.broadcast %cst_18 : f32 to vector<16x16xf32>
    %14 = arith.maximumf %12, %13 : vector<16x16xf32>
    %c1_19 = arith.constant 1 : index
    %c19 = arith.constant 19 : index
    %15 = vector.load %arg9[%c1_19, %c19] : memref<18x74xf32, #tpu.memory_space<vmem>>, vector<16x16xf32>
    tpu.vector_store %arg9[%c1_19, %c19], %14 {strides = array<i32>} : memref<18x74xf32, #tpu.memory_space<vmem>>, vector<16x16xf32>,
    %c0_20 = arith.constant 0 : index
    %c2 = arith.constant 2 : index
    %c0_21 = arith.constant 0 : index
    %c0_22 = arith.constant 0 : index
    %16 = vector.load %arg1[%c0_20, %c2, %c0_21, %c0_22] : memref<1x4x16x16xf32, #tpu.memory_space<vmem>>, vector<1x1x16x16xf32>
    %17 = vector.shape_cast %16 : vector<1x1x16x16xf32> to vector<16x16xf32>
    %cst_23 = arith.constant 0.000000e+00 : f32
    %18 = vector.broadcast %cst_23 : f32 to vector<16x16xf32>
    %19 = arith.maximumf %17, %18 : vector<16x16xf32>
    %c1_24 = arith.constant 1 : index
    %c37 = arith.constant 37 : index
    %20 = vector.load %arg9[%c1_24, %c37] : memref<18x74xf32, #tpu.memory_space<vmem>>, vector<16x16xf32>
    tpu.vector_store %arg9[%c1_24, %c37], %19 {strides = array<i32>} : memref<18x74xf32, #tpu.memory_space<vmem>>, vector<16x16xf32>,
    %c0_25 = arith.constant 0 : index
    %c3 = arith.constant 3 : index
    %c0_26 = arith.constant 0 : index
    %c0_27 = arith.constant 0 : index
    %21 = vector.load %arg1[%c0_25, %c3, %c0_26, %c0_27] : memref<1x4x16x16xf32, #tpu.memory_space<vmem>>, vector<1x1x16x16xf32>
    %22 = vector.shape_cast %21 : vector<1x1x16x16xf32> to vector<16x16xf32>
    %cst_28 = arith.constant 0.000000e+00 : f32
    %23 = vector.broadcast %cst_28 : f32 to vector<16x16xf32>
    %24 = arith.maximumf %22, %23 : vector<16x16xf32>
    %c1_29 = arith.constant 1 : index
    %c55 = arith.constant 55 : index
    %25 = vector.load %arg9[%c1_29, %c55] : memref<18x74xf32, #tpu.memory_space<vmem>>, vector<16x16xf32>
    tpu.vector_store %arg9[%c1_29, %c55], %24 {strides = array<i32>} : memref<18x74xf32, #tpu.memory_space<vmem>>, vector<16x16xf32>,
    %c0_30 = arith.constant 0 : index
    %c0_31 = arith.constant 0 : index
    %26 = vector.load %arg9[%c0_30, %c0_31] : memref<18x74xf32, #tpu.memory_space<vmem>>, vector<18x74xf32>
    %27 = vector.extract_strided_slice %26 {offsets = [0, 0], sizes = [16, 72], strides = [1, 1]} : vector<18x74xf32> to vector<16x72xf32>
    %28 = vector.extract_strided_slice %4 {offsets = [0, 0], sizes = [1, 72], strides = [1, 1]} : vector<9x72xf32> to vector<1x72xf32>
    %29 = vector.broadcast %28 : vector<1x72xf32> to vector<16x72xf32>
    %30 = arith.mulf %27, %29 : vector<16x72xf32>
    %31 = vector.extract_strided_slice %26 {offsets = [0, 1], sizes = [16, 72], strides = [1, 1]} : vector<18x74xf32> to vector<16x72xf32>
    %32 = vector.extract_strided_slice %4 {offsets = [1, 0], sizes = [1, 72], strides = [1, 1]} : vector<9x72xf32> to vector<1x72xf32>
    %33 = vector.broadcast %32 : vector<1x72xf32> to vector<16x72xf32>
    %34 = arith.mulf %31, %33 : vector<16x72xf32>
    %35 = arith.addf %30, %34 : vector<16x72xf32>
    %36 = vector.extract_strided_slice %26 {offsets = [0, 2], sizes = [16, 72], strides = [1, 1]} : vector<18x74xf32> to vector<16x72xf32>
    %37 = vector.extract_strided_slice %4 {offsets = [2, 0], sizes = [1, 72], strides = [1, 1]} : vector<9x72xf32> to vector<1x72xf32>
    %38 = vector.broadcast %37 : vector<1x72xf32> to vector<16x72xf32>
    %39 = arith.mulf %36, %38 : vector<16x72xf32>
    %40 = arith.addf %35, %39 : vector<16x72xf32>
    %41 = vector.extract_strided_slice %26 {offsets = [1, 0], sizes = [16, 72], strides = [1, 1]} : vector<18x74xf32> to vector<16x72xf32>
    %42 = vector.extract_strided_slice %4 {offsets = [3, 0], sizes = [1, 72], strides = [1, 1]} : vector<9x72xf32> to vector<1x72xf32>
    %43 = vector.broadcast %42 : vector<1x72xf32> to vector<16x72xf32>
    %44 = arith.mulf %41, %43 : vector<16x72xf32>
    %45 = arith.addf %40, %44 : vector<16x72xf32>
    %46 = vector.extract_strided_slice %26 {offsets = [1, 1], sizes = [16, 72], strides = [1, 1]} : vector<18x74xf32> to vector<16x72xf32>
    %47 = vector.extract_strided_slice %4 {offsets = [4, 0], sizes = [1, 72], strides = [1, 1]} : vector<9x72xf32> to vector<1x72xf32>
    %48 = vector.broadcast %47 : vector<1x72xf32> to vector<16x72xf32>
    %49 = arith.mulf %46, %48 : vector<16x72xf32>
    %50 = arith.addf %45, %49 : vector<16x72xf32>
    %51 = vector.extract_strided_slice %26 {offsets = [1, 2], sizes = [16, 72], strides = [1, 1]} : vector<18x74xf32> to vector<16x72xf32>
    %52 = vector.extract_strided_slice %4 {offsets = [5, 0], sizes = [1, 72], strides = [1, 1]} : vector<9x72xf32> to vector<1x72xf32>
    %53 = vector.broadcast %52 : vector<1x72xf32> to vector<16x72xf32>
    %54 = arith.mulf %51, %53 : vector<16x72xf32>
    %55 = arith.addf %50, %54 : vector<16x72xf32>
    %56 = vector.extract_strided_slice %26 {offsets = [2, 0], sizes = [16, 72], strides = [1, 1]} : vector<18x74xf32> to vector<16x72xf32>
    %57 = vector.extract_strided_slice %4 {offsets = [6, 0], sizes = [1, 72], strides = [1, 1]} : vector<9x72xf32> to vector<1x72xf32>
    %58 = vector.broadcast %57 : vector<1x72xf32> to vector<16x72xf32>
    %59 = arith.mulf %56, %58 : vector<16x72xf32>
    %60 = arith.addf %55, %59 : vector<16x72xf32>
    %61 = vector.extract_strided_slice %26 {offsets = [2, 1], sizes = [16, 72], strides = [1, 1]} : vector<18x74xf32> to vector<16x72xf32>
    %62 = vector.extract_strided_slice %4 {offsets = [7, 0], sizes = [1, 72], strides = [1, 1]} : vector<9x72xf32> to vector<1x72xf32>
    %63 = vector.broadcast %62 : vector<1x72xf32> to vector<16x72xf32>
    %64 = arith.mulf %61, %63 : vector<16x72xf32>
    %65 = arith.addf %60, %64 : vector<16x72xf32>
    %66 = vector.extract_strided_slice %26 {offsets = [2, 2], sizes = [16, 72], strides = [1, 1]} : vector<18x74xf32> to vector<16x72xf32>
    %67 = vector.extract_strided_slice %4 {offsets = [8, 0], sizes = [1, 72], strides = [1, 1]} : vector<9x72xf32> to vector<1x72xf32>
    %68 = vector.broadcast %67 : vector<1x72xf32> to vector<16x72xf32>
    %69 = arith.mulf %66, %68 : vector<16x72xf32>
    %70 = arith.addf %65, %69 : vector<16x72xf32>
    %71 = vector.extract_strided_slice %70 {offsets = [0, 0], sizes = [16, 16], strides = [1, 1]} : vector<16x72xf32> to vector<16x16xf32>
    %72 = vector.extract_strided_slice %70 {offsets = [0, 18], sizes = [16, 16], strides = [1, 1]} : vector<16x72xf32> to vector<16x16xf32>
    %73 = vector.extract_strided_slice %70 {offsets = [0, 36], sizes = [16, 16], strides = [1, 1]} : vector<16x72xf32> to vector<16x16xf32>
    %74 = vector.extract_strided_slice %70 {offsets = [0, 54], sizes = [16, 16], strides = [1, 1]} : vector<16x72xf32> to vector<16x16xf32>
    %c0_32 = arith.constant 0 : index
    %75 = memref.load %arg3[%c0_32] : memref<16xf32, #tpu.memory_space<smem>>
    %76 = vector.broadcast %75 : f32 to vector<16x16xf32>
    %77 = arith.mulf %71, %76 : vector<16x16xf32>
    %c4 = arith.constant 4 : index
    %78 = memref.load %arg3[%c4] : memref<16xf32, #tpu.memory_space<smem>>
    %79 = vector.broadcast %78 : f32 to vector<16x16xf32>
    %80 = arith.mulf %72, %79 : vector<16x16xf32>
    %81 = arith.addf %77, %80 : vector<16x16xf32>
    %c8 = arith.constant 8 : index
    %82 = memref.load %arg3[%c8] : memref<16xf32, #tpu.memory_space<smem>>
    %83 = vector.broadcast %82 : f32 to vector<16x16xf32>
    %84 = arith.mulf %73, %83 : vector<16x16xf32>
    %85 = arith.addf %81, %84 : vector<16x16xf32>
    %c12 = arith.constant 12 : index
    %86 = memref.load %arg3[%c12] : memref<16xf32, #tpu.memory_space<smem>>
    %87 = vector.broadcast %86 : f32 to vector<16x16xf32>
    %88 = arith.mulf %74, %87 : vector<16x16xf32>
    %89 = arith.addf %85, %88 : vector<16x16xf32>
    %c0_33 = arith.constant 0 : index
    %90 = memref.load %arg4[%c0_33] : memref<4xf32, #tpu.memory_space<smem>>
    %91 = vector.broadcast %90 : f32 to vector<16x16xf32>
    %92 = arith.addf %89, %91 : vector<16x16xf32>
    %cst_34 = arith.constant 0.000000e+00 : f32
    %93 = vector.broadcast %cst_34 : f32 to vector<16x16xf32>
    %94 = arith.maximumf %92, %93 : vector<16x16xf32>
    %c1_35 = arith.constant 1 : index
    %c1_36 = arith.constant 1 : index
    %95 = vector.load %arg10[%c1_35, %c1_36] : memref<18x74xf32, #tpu.memory_space<vmem>>, vector<16x16xf32>
    tpu.vector_store %arg10[%c1_35, %c1_36], %94 {strides = array<i32>} : memref<18x74xf32, #tpu.memory_space<vmem>>, vector<16x16xf32>,
    %c1_37 = arith.constant 1 : index
    %96 = memref.load %arg3[%c1_37] : memref<16xf32, #tpu.memory_space<smem>>
    %97 = vector.broadcast %96 : f32 to vector<16x16xf32>
    %98 = arith.mulf %71, %97 : vector<16x16xf32>
    %c5 = arith.constant 5 : index
    %99 = memref.load %arg3[%c5] : memref<16xf32, #tpu.memory_space<smem>>
    %100 = vector.broadcast %99 : f32 to vector<16x16xf32>
    %101 = arith.mulf %72, %100 : vector<16x16xf32>
    %102 = arith.addf %98, %101 : vector<16x16xf32>
    %c9 = arith.constant 9 : index
    %103 = memref.load %arg3[%c9] : memref<16xf32, #tpu.memory_space<smem>>
    %104 = vector.broadcast %103 : f32 to vector<16x16xf32>
    %105 = arith.mulf %73, %104 : vector<16x16xf32>
    %106 = arith.addf %102, %105 : vector<16x16xf32>
    %c13 = arith.constant 13 : index
    %107 = memref.load %arg3[%c13] : memref<16xf32, #tpu.memory_space<smem>>
    %108 = vector.broadcast %107 : f32 to vector<16x16xf32>
    %109 = arith.mulf %74, %108 : vector<16x16xf32>
    %110 = arith.addf %106, %109 : vector<16x16xf32>
    %c1_38 = arith.constant 1 : index
    %111 = memref.load %arg4[%c1_38] : memref<4xf32, #tpu.memory_space<smem>>
    %112 = vector.broadcast %111 : f32 to vector<16x16xf32>
    %113 = arith.addf %110, %112 : vector<16x16xf32>
    %cst_39 = arith.constant 0.000000e+00 : f32
    %114 = vector.broadcast %cst_39 : f32 to vector<16x16xf32>
    %115 = arith.maximumf %113, %114 : vector<16x16xf32>
    %c1_40 = arith.constant 1 : index
    %c19_41 = arith.constant 19 : index
    %116 = vector.load %arg10[%c1_40, %c19_41] : memref<18x74xf32, #tpu.memory_space<vmem>>, vector<16x16xf32>
    tpu.vector_store %arg10[%c1_40, %c19_41], %115 {strides = array<i32>} : memref<18x74xf32, #tpu.memory_space<vmem>>, vector<16x16xf32>,
    %c2_42 = arith.constant 2 : index
    %117 = memref.load %arg3[%c2_42] : memref<16xf32, #tpu.memory_space<smem>>
    %118 = vector.broadcast %117 : f32 to vector<16x16xf32>
    %119 = arith.mulf %71, %118 : vector<16x16xf32>
    %c6 = arith.constant 6 : index
    %120 = memref.load %arg3[%c6] : memref<16xf32, #tpu.memory_space<smem>>
    %121 = vector.broadcast %120 : f32 to vector<16x16xf32>
    %122 = arith.mulf %72, %121 : vector<16x16xf32>
    %123 = arith.addf %119, %122 : vector<16x16xf32>
    %c10 = arith.constant 10 : index
    %124 = memref.load %arg3[%c10] : memref<16xf32, #tpu.memory_space<smem>>
    %125 = vector.broadcast %124 : f32 to vector<16x16xf32>
    %126 = arith.mulf %73, %125 : vector<16x16xf32>
    %127 = arith.addf %123, %126 : vector<16x16xf32>
    %c14 = arith.constant 14 : index
    %128 = memref.load %arg3[%c14] : memref<16xf32, #tpu.memory_space<smem>>
    %129 = vector.broadcast %128 : f32 to vector<16x16xf32>
    %130 = arith.mulf %74, %129 : vector<16x16xf32>
    %131 = arith.addf %127, %130 : vector<16x16xf32>
    %c2_43 = arith.constant 2 : index
    %132 = memref.load %arg4[%c2_43] : memref<4xf32, #tpu.memory_space<smem>>
    %133 = vector.broadcast %132 : f32 to vector<16x16xf32>
    %134 = arith.addf %131, %133 : vector<16x16xf32>
    %cst_44 = arith.constant 0.000000e+00 : f32
    %135 = vector.broadcast %cst_44 : f32 to vector<16x16xf32>
    %136 = arith.maximumf %134, %135 : vector<16x16xf32>
    %c1_45 = arith.constant 1 : index
    %c37_46 = arith.constant 37 : index
    %137 = vector.load %arg10[%c1_45, %c37_46] : memref<18x74xf32, #tpu.memory_space<vmem>>, vector<16x16xf32>
    tpu.vector_store %arg10[%c1_45, %c37_46], %136 {strides = array<i32>} : memref<18x74xf32, #tpu.memory_space<vmem>>, vector<16x16xf32>,
    %c3_47 = arith.constant 3 : index
    %138 = memref.load %arg3[%c3_47] : memref<16xf32, #tpu.memory_space<smem>>
    %139 = vector.broadcast %138 : f32 to vector<16x16xf32>
    %140 = arith.mulf %71, %139 : vector<16x16xf32>
    %c7 = arith.constant 7 : index
    %141 = memref.load %arg3[%c7] : memref<16xf32, #tpu.memory_space<smem>>
    %142 = vector.broadcast %141 : f32 to vector<16x16xf32>
    %143 = arith.mulf %72, %142 : vector<16x16xf32>
    %144 = arith.addf %140, %143 : vector<16x16xf32>
    %c11 = arith.constant 11 : index
    %145 = memref.load %arg3[%c11] : memref<16xf32, #tpu.memory_space<smem>>
    %146 = vector.broadcast %145 : f32 to vector<16x16xf32>
    %147 = arith.mulf %73, %146 : vector<16x16xf32>
    %148 = arith.addf %144, %147 : vector<16x16xf32>
    %c15 = arith.constant 15 : index
    %149 = memref.load %arg3[%c15] : memref<16xf32, #tpu.memory_space<smem>>
    %150 = vector.broadcast %149 : f32 to vector<16x16xf32>
    %151 = arith.mulf %74, %150 : vector<16x16xf32>
    %152 = arith.addf %148, %151 : vector<16x16xf32>
    %c3_48 = arith.constant 3 : index
    %153 = memref.load %arg4[%c3_48] : memref<4xf32, #tpu.memory_space<smem>>
    %154 = vector.broadcast %153 : f32 to vector<16x16xf32>
    %155 = arith.addf %152, %154 : vector<16x16xf32>
    %cst_49 = arith.constant 0.000000e+00 : f32
    %156 = vector.broadcast %cst_49 : f32 to vector<16x16xf32>
    %157 = arith.maximumf %155, %156 : vector<16x16xf32>
    %c1_50 = arith.constant 1 : index
    %c55_51 = arith.constant 55 : index
    %158 = vector.load %arg10[%c1_50, %c55_51] : memref<18x74xf32, #tpu.memory_space<vmem>>, vector<16x16xf32>
    tpu.vector_store %arg10[%c1_50, %c55_51], %157 {strides = array<i32>} : memref<18x74xf32, #tpu.memory_space<vmem>>, vector<16x16xf32>,
    %c0_52 = arith.constant 0 : index
    %c0_53 = arith.constant 0 : index
    %159 = vector.load %arg10[%c0_52, %c0_53] : memref<18x74xf32, #tpu.memory_space<vmem>>, vector<18x74xf32>
    %160 = vector.extract_strided_slice %159 {offsets = [0, 0], sizes = [16, 72], strides = [1, 1]} : vector<18x74xf32> to vector<16x72xf32>
    %161 = vector.extract_strided_slice %5 {offsets = [0, 0], sizes = [1, 72], strides = [1, 1]} : vector<9x72xf32> to vector<1x72xf32>
    %162 = vector.broadcast %161 : vector<1x72xf32> to vector<16x72xf32>
    %163 = arith.mulf %160, %162 : vector<16x72xf32>
    %164 = vector.extract_strided_slice %159 {offsets = [0, 1], sizes = [16, 72], strides = [1, 1]} : vector<18x74xf32> to vector<16x72xf32>
    %165 = vector.extract_strided_slice %5 {offsets = [1, 0], sizes = [1, 72], strides = [1, 1]} : vector<9x72xf32> to vector<1x72xf32>
    %166 = vector.broadcast %165 : vector<1x72xf32> to vector<16x72xf32>
    %167 = arith.mulf %164, %166 : vector<16x72xf32>
    %168 = arith.addf %163, %167 : vector<16x72xf32>
    %169 = vector.extract_strided_slice %159 {offsets = [0, 2], sizes = [16, 72], strides = [1, 1]} : vector<18x74xf32> to vector<16x72xf32>
    %170 = vector.extract_strided_slice %5 {offsets = [2, 0], sizes = [1, 72], strides = [1, 1]} : vector<9x72xf32> to vector<1x72xf32>
    %171 = vector.broadcast %170 : vector<1x72xf32> to vector<16x72xf32>
    %172 = arith.mulf %169, %171 : vector<16x72xf32>
    %173 = arith.addf %168, %172 : vector<16x72xf32>
    %174 = vector.extract_strided_slice %159 {offsets = [1, 0], sizes = [16, 72], strides = [1, 1]} : vector<18x74xf32> to vector<16x72xf32>
    %175 = vector.extract_strided_slice %5 {offsets = [3, 0], sizes = [1, 72], strides = [1, 1]} : vector<9x72xf32> to vector<1x72xf32>
    %176 = vector.broadcast %175 : vector<1x72xf32> to vector<16x72xf32>
    %177 = arith.mulf %174, %176 : vector<16x72xf32>
    %178 = arith.addf %173, %177 : vector<16x72xf32>
    %179 = vector.extract_strided_slice %159 {offsets = [1, 1], sizes = [16, 72], strides = [1, 1]} : vector<18x74xf32> to vector<16x72xf32>
    %180 = vector.extract_strided_slice %5 {offsets = [4, 0], sizes = [1, 72], strides = [1, 1]} : vector<9x72xf32> to vector<1x72xf32>
    %181 = vector.broadcast %180 : vector<1x72xf32> to vector<16x72xf32>
    %182 = arith.mulf %179, %181 : vector<16x72xf32>
    %183 = arith.addf %178, %182 : vector<16x72xf32>
    %184 = vector.extract_strided_slice %159 {offsets = [1, 2], sizes = [16, 72], strides = [1, 1]} : vector<18x74xf32> to vector<16x72xf32>
    %185 = vector.extract_strided_slice %5 {offsets = [5, 0], sizes = [1, 72], strides = [1, 1]} : vector<9x72xf32> to vector<1x72xf32>
    %186 = vector.broadcast %185 : vector<1x72xf32> to vector<16x72xf32>
    %187 = arith.mulf %184, %186 : vector<16x72xf32>
    %188 = arith.addf %183, %187 : vector<16x72xf32>
    %189 = vector.extract_strided_slice %159 {offsets = [2, 0], sizes = [16, 72], strides = [1, 1]} : vector<18x74xf32> to vector<16x72xf32>
    %190 = vector.extract_strided_slice %5 {offsets = [6, 0], sizes = [1, 72], strides = [1, 1]} : vector<9x72xf32> to vector<1x72xf32>
    %191 = vector.broadcast %190 : vector<1x72xf32> to vector<16x72xf32>
    %192 = arith.mulf %189, %191 : vector<16x72xf32>
    %193 = arith.addf %188, %192 : vector<16x72xf32>
    %194 = vector.extract_strided_slice %159 {offsets = [2, 1], sizes = [16, 72], strides = [1, 1]} : vector<18x74xf32> to vector<16x72xf32>
    %195 = vector.extract_strided_slice %5 {offsets = [7, 0], sizes = [1, 72], strides = [1, 1]} : vector<9x72xf32> to vector<1x72xf32>
    %196 = vector.broadcast %195 : vector<1x72xf32> to vector<16x72xf32>
    %197 = arith.mulf %194, %196 : vector<16x72xf32>
    %198 = arith.addf %193, %197 : vector<16x72xf32>
    %199 = vector.extract_strided_slice %159 {offsets = [2, 2], sizes = [16, 72], strides = [1, 1]} : vector<18x74xf32> to vector<16x72xf32>
    %200 = vector.extract_strided_slice %5 {offsets = [8, 0], sizes = [1, 72], strides = [1, 1]} : vector<9x72xf32> to vector<1x72xf32>
    %201 = vector.broadcast %200 : vector<1x72xf32> to vector<16x72xf32>
    %202 = arith.mulf %199, %201 : vector<16x72xf32>
    %203 = arith.addf %198, %202 : vector<16x72xf32>
    %204 = vector.extract_strided_slice %203 {offsets = [0, 0], sizes = [16, 16], strides = [1, 1]} : vector<16x72xf32> to vector<16x16xf32>
    %205 = vector.extract_strided_slice %203 {offsets = [0, 18], sizes = [16, 16], strides = [1, 1]} : vector<16x72xf32> to vector<16x16xf32>
    %206 = vector.extract_strided_slice %203 {offsets = [0, 36], sizes = [16, 16], strides = [1, 1]} : vector<16x72xf32> to vector<16x16xf32>
    %207 = vector.extract_strided_slice %203 {offsets = [0, 54], sizes = [16, 16], strides = [1, 1]} : vector<16x72xf32> to vector<16x16xf32>
    %c0_54 = arith.constant 0 : index
    %208 = memref.load %arg6[%c0_54] : memref<32xf32, #tpu.memory_space<smem>>
    %209 = vector.broadcast %208 : f32 to vector<16x16xf32>
    %210 = arith.mulf %204, %209 : vector<16x16xf32>
    %c8_55 = arith.constant 8 : index
    %211 = memref.load %arg6[%c8_55] : memref<32xf32, #tpu.memory_space<smem>>
    %212 = vector.broadcast %211 : f32 to vector<16x16xf32>
    %213 = arith.mulf %205, %212 : vector<16x16xf32>
    %214 = arith.addf %210, %213 : vector<16x16xf32>
    %c16 = arith.constant 16 : index
    %215 = memref.load %arg6[%c16] : memref<32xf32, #tpu.memory_space<smem>>
    %216 = vector.broadcast %215 : f32 to vector<16x16xf32>
    %217 = arith.mulf %206, %216 : vector<16x16xf32>
    %218 = arith.addf %214, %217 : vector<16x16xf32>
    %c24 = arith.constant 24 : index
    %219 = memref.load %arg6[%c24] : memref<32xf32, #tpu.memory_space<smem>>
    %220 = vector.broadcast %219 : f32 to vector<16x16xf32>
    %221 = arith.mulf %207, %220 : vector<16x16xf32>
    %222 = arith.addf %218, %221 : vector<16x16xf32>
    %c0_56 = arith.constant 0 : index
    %223 = memref.load %arg7[%c0_56] : memref<8xf32, #tpu.memory_space<smem>>
    %224 = vector.broadcast %223 : f32 to vector<16x16xf32>
    %225 = arith.addf %222, %224 : vector<16x16xf32>
    %c0_57 = arith.constant 0 : index
    %c0_58 = arith.constant 0 : index
    %c0_59 = arith.constant 0 : index
    %226 = vector.load %arg8[%c0_57, %c0_58, %c0_59] : memref<1x16x128xf32, #tpu.memory_space<vmem>>, vector<1x16x16xf32>
    %227 = vector.shape_cast %226 : vector<1x16x16xf32> to vector<16x16xf32>
    %228 = vector.shape_cast %225 : vector<16x16xf32> to vector<1x16x16xf32>
    tpu.vector_store %arg8[%c0_57, %c0_58, %c0_59], %228 {strides = array<i32>} : memref<1x16x128xf32, #tpu.memory_space<vmem>>, vector<1x16x16xf32>,
    %c1_60 = arith.constant 1 : index
    %229 = memref.load %arg6[%c1_60] : memref<32xf32, #tpu.memory_space<smem>>
    %230 = vector.broadcast %229 : f32 to vector<16x16xf32>
    %231 = arith.mulf %204, %230 : vector<16x16xf32>
    %c9_61 = arith.constant 9 : index
    %232 = memref.load %arg6[%c9_61] : memref<32xf32, #tpu.memory_space<smem>>
    %233 = vector.broadcast %232 : f32 to vector<16x16xf32>
    %234 = arith.mulf %205, %233 : vector<16x16xf32>
    %235 = arith.addf %231, %234 : vector<16x16xf32>
    %c17 = arith.constant 17 : index
    %236 = memref.load %arg6[%c17] : memref<32xf32, #tpu.memory_space<smem>>
    %237 = vector.broadcast %236 : f32 to vector<16x16xf32>
    %238 = arith.mulf %206, %237 : vector<16x16xf32>
    %239 = arith.addf %235, %238 : vector<16x16xf32>
    %c25 = arith.constant 25 : index
    %240 = memref.load %arg6[%c25] : memref<32xf32, #tpu.memory_space<smem>>
    %241 = vector.broadcast %240 : f32 to vector<16x16xf32>
    %242 = arith.mulf %207, %241 : vector<16x16xf32>
    %243 = arith.addf %239, %242 : vector<16x16xf32>
    %c1_62 = arith.constant 1 : index
    %244 = memref.load %arg7[%c1_62] : memref<8xf32, #tpu.memory_space<smem>>
    %245 = vector.broadcast %244 : f32 to vector<16x16xf32>
    %246 = arith.addf %243, %245 : vector<16x16xf32>
    %c0_63 = arith.constant 0 : index
    %c0_64 = arith.constant 0 : index
    %c16_65 = arith.constant 16 : index
    %247 = vector.load %arg8[%c0_63, %c0_64, %c16_65] : memref<1x16x128xf32, #tpu.memory_space<vmem>>, vector<1x16x16xf32>
    %248 = vector.shape_cast %247 : vector<1x16x16xf32> to vector<16x16xf32>
    %249 = vector.shape_cast %246 : vector<16x16xf32> to vector<1x16x16xf32>
    tpu.vector_store %arg8[%c0_63, %c0_64, %c16_65], %249 {strides = array<i32>} : memref<1x16x128xf32, #tpu.memory_space<vmem>>, vector<1x16x16xf32>,
    %c2_66 = arith.constant 2 : index
    %250 = memref.load %arg6[%c2_66] : memref<32xf32, #tpu.memory_space<smem>>
    %251 = vector.broadcast %250 : f32 to vector<16x16xf32>
    %252 = arith.mulf %204, %251 : vector<16x16xf32>
    %c10_67 = arith.constant 10 : index
    %253 = memref.load %arg6[%c10_67] : memref<32xf32, #tpu.memory_space<smem>>
    %254 = vector.broadcast %253 : f32 to vector<16x16xf32>
    %255 = arith.mulf %205, %254 : vector<16x16xf32>
    %256 = arith.addf %252, %255 : vector<16x16xf32>
    %c18 = arith.constant 18 : index
    %257 = memref.load %arg6[%c18] : memref<32xf32, #tpu.memory_space<smem>>
    %258 = vector.broadcast %257 : f32 to vector<16x16xf32>
    %259 = arith.mulf %206, %258 : vector<16x16xf32>
    %260 = arith.addf %256, %259 : vector<16x16xf32>
    %c26 = arith.constant 26 : index
    %261 = memref.load %arg6[%c26] : memref<32xf32, #tpu.memory_space<smem>>
    %262 = vector.broadcast %261 : f32 to vector<16x16xf32>
    %263 = arith.mulf %207, %262 : vector<16x16xf32>
    %264 = arith.addf %260, %263 : vector<16x16xf32>
    %c2_68 = arith.constant 2 : index
    %265 = memref.load %arg7[%c2_68] : memref<8xf32, #tpu.memory_space<smem>>
    %266 = vector.broadcast %265 : f32 to vector<16x16xf32>
    %267 = arith.addf %264, %266 : vector<16x16xf32>
    %c0_69 = arith.constant 0 : index
    %c0_70 = arith.constant 0 : index
    %c32 = arith.constant 32 : index
    %268 = vector.load %arg8[%c0_69, %c0_70, %c32] : memref<1x16x128xf32, #tpu.memory_space<vmem>>, vector<1x16x16xf32>
    %269 = vector.shape_cast %268 : vector<1x16x16xf32> to vector<16x16xf32>
    %270 = vector.shape_cast %267 : vector<16x16xf32> to vector<1x16x16xf32>
    tpu.vector_store %arg8[%c0_69, %c0_70, %c32], %270 {strides = array<i32>} : memref<1x16x128xf32, #tpu.memory_space<vmem>>, vector<1x16x16xf32>,
    %c3_71 = arith.constant 3 : index
    %271 = memref.load %arg6[%c3_71] : memref<32xf32, #tpu.memory_space<smem>>
    %272 = vector.broadcast %271 : f32 to vector<16x16xf32>
    %273 = arith.mulf %204, %272 : vector<16x16xf32>
    %c11_72 = arith.constant 11 : index
    %274 = memref.load %arg6[%c11_72] : memref<32xf32, #tpu.memory_space<smem>>
    %275 = vector.broadcast %274 : f32 to vector<16x16xf32>
    %276 = arith.mulf %205, %275 : vector<16x16xf32>
    %277 = arith.addf %273, %276 : vector<16x16xf32>
    %c19_73 = arith.constant 19 : index
    %278 = memref.load %arg6[%c19_73] : memref<32xf32, #tpu.memory_space<smem>>
    %279 = vector.broadcast %278 : f32 to vector<16x16xf32>
    %280 = arith.mulf %206, %279 : vector<16x16xf32>
    %281 = arith.addf %277, %280 : vector<16x16xf32>
    %c27 = arith.constant 27 : index
    %282 = memref.load %arg6[%c27] : memref<32xf32, #tpu.memory_space<smem>>
    %283 = vector.broadcast %282 : f32 to vector<16x16xf32>
    %284 = arith.mulf %207, %283 : vector<16x16xf32>
    %285 = arith.addf %281, %284 : vector<16x16xf32>
    %c3_74 = arith.constant 3 : index
    %286 = memref.load %arg7[%c3_74] : memref<8xf32, #tpu.memory_space<smem>>
    %287 = vector.broadcast %286 : f32 to vector<16x16xf32>
    %288 = arith.addf %285, %287 : vector<16x16xf32>
    %c0_75 = arith.constant 0 : index
    %c0_76 = arith.constant 0 : index
    %c48 = arith.constant 48 : index
    %289 = vector.load %arg8[%c0_75, %c0_76, %c48] : memref<1x16x128xf32, #tpu.memory_space<vmem>>, vector<1x16x16xf32>
    %290 = vector.shape_cast %289 : vector<1x16x16xf32> to vector<16x16xf32>
    %291 = vector.shape_cast %288 : vector<16x16xf32> to vector<1x16x16xf32>
    tpu.vector_store %arg8[%c0_75, %c0_76, %c48], %291 {strides = array<i32>} : memref<1x16x128xf32, #tpu.memory_space<vmem>>, vector<1x16x16xf32>,
    %c4_77 = arith.constant 4 : index
    %292 = memref.load %arg6[%c4_77] : memref<32xf32, #tpu.memory_space<smem>>
    %293 = vector.broadcast %292 : f32 to vector<16x16xf32>
    %294 = arith.mulf %204, %293 : vector<16x16xf32>
    %c12_78 = arith.constant 12 : index
    %295 = memref.load %arg6[%c12_78] : memref<32xf32, #tpu.memory_space<smem>>
    %296 = vector.broadcast %295 : f32 to vector<16x16xf32>
    %297 = arith.mulf %205, %296 : vector<16x16xf32>
    %298 = arith.addf %294, %297 : vector<16x16xf32>
    %c20 = arith.constant 20 : index
    %299 = memref.load %arg6[%c20] : memref<32xf32, #tpu.memory_space<smem>>
    %300 = vector.broadcast %299 : f32 to vector<16x16xf32>
    %301 = arith.mulf %206, %300 : vector<16x16xf32>
    %302 = arith.addf %298, %301 : vector<16x16xf32>
    %c28 = arith.constant 28 : index
    %303 = memref.load %arg6[%c28] : memref<32xf32, #tpu.memory_space<smem>>
    %304 = vector.broadcast %303 : f32 to vector<16x16xf32>
    %305 = arith.mulf %207, %304 : vector<16x16xf32>
    %306 = arith.addf %302, %305 : vector<16x16xf32>
    %c4_79 = arith.constant 4 : index
    %307 = memref.load %arg7[%c4_79] : memref<8xf32, #tpu.memory_space<smem>>
    %308 = vector.broadcast %307 : f32 to vector<16x16xf32>
    %309 = arith.addf %306, %308 : vector<16x16xf32>
    %c0_80 = arith.constant 0 : index
    %c0_81 = arith.constant 0 : index
    %c64 = arith.constant 64 : index
    %310 = vector.load %arg8[%c0_80, %c0_81, %c64] : memref<1x16x128xf32, #tpu.memory_space<vmem>>, vector<1x16x16xf32>
    %311 = vector.shape_cast %310 : vector<1x16x16xf32> to vector<16x16xf32>
    %312 = vector.shape_cast %309 : vector<16x16xf32> to vector<1x16x16xf32>
    tpu.vector_store %arg8[%c0_80, %c0_81, %c64], %312 {strides = array<i32>} : memref<1x16x128xf32, #tpu.memory_space<vmem>>, vector<1x16x16xf32>,
    %c5_82 = arith.constant 5 : index
    %313 = memref.load %arg6[%c5_82] : memref<32xf32, #tpu.memory_space<smem>>
    %314 = vector.broadcast %313 : f32 to vector<16x16xf32>
    %315 = arith.mulf %204, %314 : vector<16x16xf32>
    %c13_83 = arith.constant 13 : index
    %316 = memref.load %arg6[%c13_83] : memref<32xf32, #tpu.memory_space<smem>>
    %317 = vector.broadcast %316 : f32 to vector<16x16xf32>
    %318 = arith.mulf %205, %317 : vector<16x16xf32>
    %319 = arith.addf %315, %318 : vector<16x16xf32>
    %c21 = arith.constant 21 : index
    %320 = memref.load %arg6[%c21] : memref<32xf32, #tpu.memory_space<smem>>
    %321 = vector.broadcast %320 : f32 to vector<16x16xf32>
    %322 = arith.mulf %206, %321 : vector<16x16xf32>
    %323 = arith.addf %319, %322 : vector<16x16xf32>
    %c29 = arith.constant 29 : index
    %324 = memref.load %arg6[%c29] : memref<32xf32, #tpu.memory_space<smem>>
    %325 = vector.broadcast %324 : f32 to vector<16x16xf32>
    %326 = arith.mulf %207, %325 : vector<16x16xf32>
    %327 = arith.addf %323, %326 : vector<16x16xf32>
    %c5_84 = arith.constant 5 : index
    %328 = memref.load %arg7[%c5_84] : memref<8xf32, #tpu.memory_space<smem>>
    %329 = vector.broadcast %328 : f32 to vector<16x16xf32>
    %330 = arith.addf %327, %329 : vector<16x16xf32>
    %c0_85 = arith.constant 0 : index
    %c0_86 = arith.constant 0 : index
    %c80 = arith.constant 80 : index
    %331 = vector.load %arg8[%c0_85, %c0_86, %c80] : memref<1x16x128xf32, #tpu.memory_space<vmem>>, vector<1x16x16xf32>
    %332 = vector.shape_cast %331 : vector<1x16x16xf32> to vector<16x16xf32>
    %333 = vector.shape_cast %330 : vector<16x16xf32> to vector<1x16x16xf32>
    tpu.vector_store %arg8[%c0_85, %c0_86, %c80], %333 {strides = array<i32>} : memref<1x16x128xf32, #tpu.memory_space<vmem>>, vector<1x16x16xf32>,
    %c6_87 = arith.constant 6 : index
    %334 = memref.load %arg6[%c6_87] : memref<32xf32, #tpu.memory_space<smem>>
    %335 = vector.broadcast %334 : f32 to vector<16x16xf32>
    %336 = arith.mulf %204, %335 : vector<16x16xf32>
    %c14_88 = arith.constant 14 : index
    %337 = memref.load %arg6[%c14_88] : memref<32xf32, #tpu.memory_space<smem>>
    %338 = vector.broadcast %337 : f32 to vector<16x16xf32>
    %339 = arith.mulf %205, %338 : vector<16x16xf32>
    %340 = arith.addf %336, %339 : vector<16x16xf32>
    %c22 = arith.constant 22 : index
    %341 = memref.load %arg6[%c22] : memref<32xf32, #tpu.memory_space<smem>>
    %342 = vector.broadcast %341 : f32 to vector<16x16xf32>
    %343 = arith.mulf %206, %342 : vector<16x16xf32>
    %344 = arith.addf %340, %343 : vector<16x16xf32>
    %c30 = arith.constant 30 : index
    %345 = memref.load %arg6[%c30] : memref<32xf32, #tpu.memory_space<smem>>
    %346 = vector.broadcast %345 : f32 to vector<16x16xf32>
    %347 = arith.mulf %207, %346 : vector<16x16xf32>
    %348 = arith.addf %344, %347 : vector<16x16xf32>
    %c6_89 = arith.constant 6 : index
    %349 = memref.load %arg7[%c6_89] : memref<8xf32, #tpu.memory_space<smem>>
    %350 = vector.broadcast %349 : f32 to vector<16x16xf32>
    %351 = arith.addf %348, %350 : vector<16x16xf32>
    %c0_90 = arith.constant 0 : index
    %c0_91 = arith.constant 0 : index
    %c96 = arith.constant 96 : index
    %352 = vector.load %arg8[%c0_90, %c0_91, %c96] : memref<1x16x128xf32, #tpu.memory_space<vmem>>, vector<1x16x16xf32>
    %353 = vector.shape_cast %352 : vector<1x16x16xf32> to vector<16x16xf32>
    %354 = vector.shape_cast %351 : vector<16x16xf32> to vector<1x16x16xf32>
    tpu.vector_store %arg8[%c0_90, %c0_91, %c96], %354 {strides = array<i32>} : memref<1x16x128xf32, #tpu.memory_space<vmem>>, vector<1x16x16xf32>,
    %c7_92 = arith.constant 7 : index
    %355 = memref.load %arg6[%c7_92] : memref<32xf32, #tpu.memory_space<smem>>
    %356 = vector.broadcast %355 : f32 to vector<16x16xf32>
    %357 = arith.mulf %204, %356 : vector<16x16xf32>
    %c15_93 = arith.constant 15 : index
    %358 = memref.load %arg6[%c15_93] : memref<32xf32, #tpu.memory_space<smem>>
    %359 = vector.broadcast %358 : f32 to vector<16x16xf32>
    %360 = arith.mulf %205, %359 : vector<16x16xf32>
    %361 = arith.addf %357, %360 : vector<16x16xf32>
    %c23 = arith.constant 23 : index
    %362 = memref.load %arg6[%c23] : memref<32xf32, #tpu.memory_space<smem>>
    %363 = vector.broadcast %362 : f32 to vector<16x16xf32>
    %364 = arith.mulf %206, %363 : vector<16x16xf32>
    %365 = arith.addf %361, %364 : vector<16x16xf32>
    %c31 = arith.constant 31 : index
    %366 = memref.load %arg6[%c31] : memref<32xf32, #tpu.memory_space<smem>>
    %367 = vector.broadcast %366 : f32 to vector<16x16xf32>
    %368 = arith.mulf %207, %367 : vector<16x16xf32>
    %369 = arith.addf %365, %368 : vector<16x16xf32>
    %c7_94 = arith.constant 7 : index
    %370 = memref.load %arg7[%c7_94] : memref<8xf32, #tpu.memory_space<smem>>
    %371 = vector.broadcast %370 : f32 to vector<16x16xf32>
    %372 = arith.addf %369, %371 : vector<16x16xf32>
    %c0_95 = arith.constant 0 : index
    %c0_96 = arith.constant 0 : index
    %c112 = arith.constant 112 : index
    %373 = vector.load %arg8[%c0_95, %c0_96, %c112] : memref<1x16x128xf32, #tpu.memory_space<vmem>>, vector<1x16x16xf32>
    %374 = vector.shape_cast %373 : vector<1x16x16xf32> to vector<16x16xf32>
    %375 = vector.shape_cast %372 : vector<16x16xf32> to vector<1x16x16xf32>
    tpu.vector_store %arg8[%c0_95, %c0_96, %c112], %375 {strides = array<i32>} : memref<1x16x128xf32, #tpu.memory_space<vmem>>, vector<1x16x16xf32>,
    return
  }
  func.func @transform_0(%arg0: i32) -> (i32, i32, i32, i32) {
    %c0_i32 = arith.constant 0 : i32
    %c0_i32_0 = arith.constant 0 : i32
    %c0_i32_1 = arith.constant 0 : i32
    %c0_i32_2 = arith.constant 0 : i32
    return %arg0, %c0_i32, %c0_i32_0, %c0_i32_1 : i32, i32, i32, i32
  }
  func.func @transform_1(%arg0: i32) -> (i32, i32) {
    %c0_i32 = arith.constant 0 : i32
    %c0_i32_0 = arith.constant 0 : i32
    %c0_i32_1 = arith.constant 0 : i32
    return %c0_i32, %c0_i32_0 : i32, i32
  }
  func.func @transform_2(%arg0: i32) -> i32 {
    %c0_i32 = arith.constant 0 : i32
    %c0_i32_0 = arith.constant 0 : i32
    return %c0_i32 : i32
  }
  func.func @transform_3(%arg0: i32) -> i32 {
    %c0_i32 = arith.constant 0 : i32
    %c0_i32_0 = arith.constant 0 : i32
    return %c0_i32 : i32
  }
  func.func @transform_4(%arg0: i32) -> (i32, i32) {
    %c0_i32 = arith.constant 0 : i32
    %c0_i32_0 = arith.constant 0 : i32
    %c0_i32_1 = arith.constant 0 : i32
    return %c0_i32, %c0_i32_0 : i32, i32
  }
  func.func @transform_5(%arg0: i32) -> i32 {
    %c0_i32 = arith.constant 0 : i32
    %c0_i32_0 = arith.constant 0 : i32
    return %c0_i32 : i32
  }
  func.func @transform_6(%arg0: i32) -> i32 {
    %c0_i32 = arith.constant 0 : i32
    %c0_i32_0 = arith.constant 0 : i32
    return %c0_i32 : i32
  }
  func.func @transform_7(%arg0: i32) -> (i32, i32, i32) {
    %c0_i32 = arith.constant 0 : i32
    %c0_i32_0 = arith.constant 0 : i32
    %c0_i32_1 = arith.constant 0 : i32
    return %arg0, %c0_i32, %c0_i32_0 : i32, i32, i32
  }
}

</mosaic_0001>

<llo_original>
// kernel: sepconv_forward.1
$region0: #{sepconv_forward.1}
  #allocation0 [shape = 'u32[]', space=smem, size = 0x4, offset = 0x4, fixed_abs, tag = 'smem constant byte address 0x4 - core index']
  #allocation1 [shape = 'u32[144,128]{1,0:T(1,128)}', space=vmem, size = 0x12000, scoped, tag = 'internal scratch']
  #allocation2 [shape = 'f32[18,74]{1,0:T(8,128)}', space=vmem, size = 0x3000, scoped, tag = 'scratch operand']
  #allocation3 [shape = 'f32[18,74]{1,0:T(8,128)}', space=vmem, size = 0x3000, scoped, tag = 'scratch operand']
  %s0 = inlined_call_operand.vmem [shape: f32[2,4,16,16], index: 0, kind: input, shape index: {}]
  %s1 = inlined_call_operand.vmem [shape: f32[9,72], index: 1, kind: input, shape index: {}]
  %s2 = inlined_call_operand.vmem [shape: f32[16], index: 2, kind: input, shape index: {}]
  %s3 = inlined_call_operand.vmem [shape: f32[4], index: 3, kind: input, shape index: {}]
  %s4 = inlined_call_operand.vmem [shape: f32[9,72], index: 4, kind: input, shape index: {}]
  %s5 = inlined_call_operand.vmem [shape: f32[32], index: 5, kind: input, shape index: {}]
  %s6 = inlined_call_operand.vmem [shape: f32[8], index: 6, kind: input, shape index: {}]
  %s7 = inlined_call_operand.vmem [shape: f32[2,16,128], index: 7, kind: output, shape index: {}]
  %s8 = sld [smem:[#allocation0]]
  $region77: #{sepconv_forward.1} parent=0
    _
  %s10 = ssub.s32 1, %s8
  %s11 = scalar_select 0, %s10, %s8
  $region1: #{sepconv_forward.1} parent=0
    #allocation4 [shape = 'u8[512]{0}', space=smem, size = 0x200, scoped, tag = 'input window, operand 2, single buffered']
    #allocation5 [shape = 's32[2]{0}', space=sflag, size = 0x8, scoped, tag = 'scoped memory for sepconv_forward.1']
    #allocation6 [shape = 'u8[512]{0}', space=smem, size = 0x200, scoped, tag = 'input window, operand 3, single buffered']
    #allocation7 [shape = 's32[1]{0}', space=sflag, size = 0x4, scoped, tag = 'scoped memory for sepconv_forward.1']
    #allocation8 [shape = 'u8[512]{0}', space=smem, size = 0x200, scoped, tag = 'input window, operand 5, single buffered']
    #allocation9 [shape = 'u8[512]{0}', space=smem, size = 0x200, scoped, tag = 'input window, operand 6, single buffered']
    #allocation10 [shape = 's32[1]{0}', space=sflag, size = 0x4, scoped, tag = 'scoped memory for sepconv_forward.1']
    %12 = vsyncpa [#allocation5], 0
    %13 = vsyncpa [#allocation7], 0
    %14 = vsyncpa [#allocation10], 0
    loop: start=0, step=1, limit=4
    $region2: #{sepconv_forward.1} parent=1 // loop_pre_header
      _
    $region3: #{sepconv_forward.1} parent=1 // loop_header
      %s16 = sphi 0, %s20
      %p17 = scmp.ge.s32.totalorder %s16, 4
      %s26 = sphi 0, %s28
      %s29 = sphi 0, %s26
      %s30 = sphi 0, %s29
      %s46 = sphi 0, %s30
      %s50 = sphi 0, %s50
      %s52 = sphi 0, %s50
      %s53 = sphi 0, %s52
      %s67 = sphi 0, %s53
      %s71 = sphi 0, %s71
      %s73 = sphi 0, %s71
      %s74 = sphi 0, %s73
      %s88 = sphi 0, %s74
      %s92 = sphi 0, %s92
      %s94 = sphi 0, %s92
      %s95 = sphi 0, %s94
      %s109 = sphi 0, %s95
      %s113 = sphi 0, %s113
      %s115 = sphi 0, %s113
      %s116 = sphi 0, %s115
      %s130 = sphi 0, %s116
      %s134 = sphi 0, %s134
      %s136 = sphi 0, %s134
      %s137 = sphi 0, %s136
      %s151 = sphi 0, %s137
      %s155 = sphi 0, %s155
      %s157 = sphi 0, %s155
      %s158 = sphi 0, %s157
      %s172 = sphi 0, %s158
      %s178 = sphi 0, %s180
      %s181 = sphi 0, %s178
      %s182 = sphi 0, %s181
      %s198 = sphi 0, %s182
    $region4: #{sepconv_forward.1} parent=1 // loop_header_branch
      %19 = sbr.rel (%p17) target = $region8
    $region5: #{sepconv_forward.1} parent=1 // loop_body
      %s21 = ssub.s32 %s16, 1
      %s22 = ssub.s32 %s16, 2
      %s23 = sadd.s32 %s16, 1
      %s24 = ssub.s32 %s16, %s23
      %p25 = scmp.eq.s32.totalorder %s24, 0
      %s27 = sadd.s32 %s26, 1
      %s28 = scalar_select %p25, %s26, %s27
      %p31 = pneg %p25
      %p32 = scmp.eq.s32.totalorder %s16, 1
      %p33 = por %p31, %p32
      %p34 = scmp.ne.s32.totalorder %s26, %s29
      %p35 = scmp.eq.s32.totalorder %s16, 0
      %p36 = por %p34, %p35
      %p37 = scmp.ne.s32.totalorder %s26, %s29
      %p38 = scmp.eq.s32.totalorder %s21, 1
      %p39 = por %p37, %p38
      %p40 = scmp.ne.s32.totalorder %s29, %s30
      %p41 = scmp.eq.s32.totalorder %s21, 0
      %p42 = por %p40, %p41
      %p43 = scmp.ne.s32.totalorder %s29, %s30
      %p44 = scmp.eq.s32.totalorder %s22, 1
      %p45 = por %p43, %p44
      %p47 = scmp.ne.s32.totalorder %s30, %s46
      %p48 = scmp.eq.s32.totalorder %s22, 0
      %p49 = por %p47, %p48
      %s51 = sadd.s32 %s50, 1
      %p54 = scmp.eq.s32.totalorder %s16, 1
      %p55 = scmp.ne.s32.totalorder %s50, %s52
      %p56 = scmp.eq.s32.totalorder %s16, 0
      %p57 = por %p55, %p56
      %p58 = scmp.ne.s32.totalorder %s50, %s52
      %p59 = scmp.eq.s32.totalorder %s21, 1
      %p60 = por %p58, %p59
      %p61 = scmp.ne.s32.totalorder %s52, %s53
      %p62 = scmp.eq.s32.totalorder %s21, 0
      %p63 = por %p61, %p62
      %p64 = scmp.ne.s32.totalorder %s52, %s53
      %p65 = scmp.eq.s32.totalorder %s22, 1
      %p66 = por %p64, %p65
      %p68 = scmp.ne.s32.totalorder %s53, %s67
      %p69 = scmp.eq.s32.totalorder %s22, 0
      %p70 = por %p68, %p69
      %s72 = sadd.s32 %s71, 1
      %p75 = scmp.eq.s32.totalorder %s16, 1
      %p76 = scmp.ne.s32.totalorder %s71, %s73
      %p77 = scmp.eq.s32.totalorder %s16, 0
      %p78 = por %p76, %p77
      %p79 = scmp.ne.s32.totalorder %s71, %s73
      %p80 = scmp.eq.s32.totalorder %s21, 1
      %p81 = por %p79, %p80
      %p82 = scmp.ne.s32.totalorder %s73, %s74
      %p83 = scmp.eq.s32.totalorder %s21, 0
      %p84 = por %p82, %p83
      %p85 = scmp.ne.s32.totalorder %s73, %s74
      %p86 = scmp.eq.s32.totalorder %s22, 1
      %p87 = por %p85, %p86
      %p89 = scmp.ne.s32.totalorder %s74, %s88
      %p90 = scmp.eq.s32.totalorder %s22, 0
      %p91 = por %p89, %p90
      %s93 = sadd.s32 %s92, 1
      %p96 = scmp.eq.s32.totalorder %s16, 1
      %p97 = scmp.ne.s32.totalorder %s92, %s94
      %p98 = scmp.eq.s32.totalorder %s16, 0
      %p99 = por %p97, %p98
      %p100 = scmp.ne.s32.totalorder %s92, %s94
      %p101 = scmp.eq.s32.totalorder %s21, 1
      %p102 = por %p100, %p101
      %p103 = scmp.ne.s32.totalorder %s94, %s95
      %p104 = scmp.eq.s32.totalorder %s21, 0
      %p105 = por %p103, %p104
      %p106 = scmp.ne.s32.totalorder %s94, %s95
      %p107 = scmp.eq.s32.totalorder %s22, 1
      %p108 = por %p106, %p107
      %p110 = scmp.ne.s32.totalorder %s95, %s109
      %p111 = scmp.eq.s32.totalorder %s22, 0
      %p112 = por %p110, %p111
      %s114 = sadd.s32 %s113, 1
      %p117 = scmp.eq.s32.totalorder %s16, 1
      %p118 = scmp.ne.s32.totalorder %s113, %s115
      %p119 = scmp.eq.s32.totalorder %s16, 0
      %p120 = por %p118, %p119
      %p121 = scmp.ne.s32.totalorder %s113, %s115
      %p122 = scmp.eq.s32.totalorder %s21, 1
      %p123 = por %p121, %p122
      %p124 = scmp.ne.s32.totalorder %s115, %s116
      %p125 = scmp.eq.s32.totalorder %s21, 0
      %p126 = por %p124, %p125
      %p127 = scmp.ne.s32.totalorder %s115, %s116
      %p128 = scmp.eq.s32.totalorder %s22, 1
      %p129 = por %p127, %p128
      %p131 = scmp.ne.s32.totalorder %s116, %s130
      %p132 = scmp.eq.s32.totalorder %s22, 0
      %p133 = por %p131, %p132
      %s135 = sadd.s32 %s134, 1
      %p138 = scmp.eq.s32.totalorder %s16, 1
      %p139 = scmp.ne.s32.totalorder %s134, %s136
      %p140 = scmp.eq.s32.totalorder %s16, 0
      %p141 = por %p139, %p140
      %p142 = scmp.ne.s32.totalorder %s134, %s136
      %p143 = scmp.eq.s32.totalorder %s21, 1
      %p144 = por %p142, %p143
      %p145 = scmp.ne.s32.totalorder %s136, %s137
      %p146 = scmp.eq.s32.totalorder %s21, 0
      %p147 = por %p145, %p146
      %p148 = scmp.ne.s32.totalorder %s136, %s137
      %p149 = scmp.eq.s32.totalorder %s22, 1
      %p150 = por %p148, %p149
      %p152 = scmp.ne.s32.totalorder %s137, %s151
      %p153 = scmp.eq.s32.totalorder %s22, 0
      %p154 = por %p152, %p153
      %s156 = sadd.s32 %s155, 1
      %p159 = scmp.eq.s32.totalorder %s16, 1
      %p160 = scmp.ne.s32.totalorder %s155, %s157
      %p161 = scmp.eq.s32.totalorder %s16, 0
      %p162 = por %p160, %p161
      %p163 = scmp.ne.s32.totalorder %s155, %s157
      %p164 = scmp.eq.s32.totalorder %s21, 1
      %p165 = por %p163, %p164
      %p166 = scmp.ne.s32.totalorder %s157, %s158
      %p167 = scmp.eq.s32.totalorder %s21, 0
      %p168 = por %p166, %p167
      %p169 = scmp.ne.s32.totalorder %s157, %s158
      %p170 = scmp.eq.s32.totalorder %s22, 1
      %p171 = por %p169, %p170
      %p173 = scmp.ne.s32.totalorder %s158, %s172
      %p174 = scmp.eq.s32.totalorder %s22, 0
      %p175 = por %p173, %p174
      %s176 = ssub.s32 %s16, %s23
      %p177 = scmp.eq.s32.totalorder %s176, 0
      %s179 = sadd.s32 %s178, 1
      %s180 = scalar_select %p177, %s178, %s179
      %p183 = pneg %p177
      %p184 = scmp.eq.s32.totalorder %s16, 1
      %p185 = por %p183, %p184
      %p186 = scmp.ne.s32.totalorder %s178, %s181
      %p187 = scmp.eq.s32.totalorder %s16, 0
      %p188 = por %p186, %p187
      %p189 = scmp.ne.s32.totalorder %s178, %s181
      %p190 = scmp.eq.s32.totalorder %s21, 1
      %p191 = por %p189, %p190
      %p192 = scmp.ne.s32.totalorder %s181, %s182
      %p193 = scmp.eq.s32.totalorder %s21, 0
      %p194 = por %p192, %p193
      %p195 = scmp.ne.s32.totalorder %s181, %s182
      %p196 = scmp.eq.s32.totalorder %s22, 1
      %p197 = por %p195, %p196
      %p199 = scmp.ne.s32.totalorder %s182, %s198
      %p200 = scmp.eq.s32.totalorder %s22, 0
      %p201 = por %p199, %p200
      %p202 = scmp.le.s32.totalorder 1, %s16
      %p203 = scmp.lt.s32.totalorder %s16, 3
      %p204 = pnand %p202, %p203
      %p205 = pneg %p204
      // Predicated region
      $region9: #{sepconv_forward.1} parent=5 // pred_check
        _
      $region10: #{sepconv_forward.1} parent=5 // pred_check_branch
        %207 = sbr.rel (%p204) target = $region12
      $region11: #{sepconv_forward.1} parent=5 // pred_region
        %s208 = ssub.s32 %s16, 1
        // Predicated region
        $region13: #{sepconv_forward.1} parent=11 // pred_check
          %p209 = pneg %p63
        $region14: #{sepconv_forward.1} parent=11 // pred_check_branch
          %211 = sbr.rel (%p209) target = $region16
        $region15: #{sepconv_forward.1} parent=11 // pred_region
          _
        $region16: #{sepconv_forward.1} parent=11 // pred_fallthru
          _
        // Predicated region
        $region17: #{sepconv_forward.1} parent=11 // pred_check
          %p212 = pneg %p84
        $region18: #{sepconv_forward.1} parent=11 // pred_check_branch
          %214 = sbr.rel (%p212) target = $region20
        $region19: #{sepconv_forward.1} parent=11 // pred_region
          %s216 = ssub.s32 16, 16
          %217 = vsyncadd [#allocation5], %s216
          %s219 = sshll.u32 %s2, 4
          %s220 = int_to_ptr.vmem [resolvable:$true] %s219
          %222 = dma.vmem_to_smem %s220, 16, [#allocation4], [#allocation5]
        $region20: #{sepconv_forward.1} parent=11 // pred_fallthru
          _
        // Predicated region
        $region21: #{sepconv_forward.1} parent=11 // pred_check
          %p223 = pneg %p105
        $region22: #{sepconv_forward.1} parent=11 // pred_check_branch
          %225 = sbr.rel (%p223) target = $region24
        $region23: #{sepconv_forward.1} parent=11 // pred_region
          %s227 = ssub.s32 16, 16
          %228 = vsyncadd [#allocation7], %s227
          %s230 = sshll.u32 %s3, 4
          %s231 = int_to_ptr.vmem [resolvable:$true] %s230
          %233 = dma.vmem_to_smem %s231, 16, [#allocation6], [#allocation7]
        $region24: #{sepconv_forward.1} parent=11 // pred_fallthru
          _
        // Predicated region
        $region25: #{sepconv_forward.1} parent=11 // pred_check
          %p234 = pneg %p126
        $region26: #{sepconv_forward.1} parent=11 // pred_check_branch
          %236 = sbr.rel (%p234) target = $region28
        $region27: #{sepconv_forward.1} parent=11 // pred_region
          _
        $region28: #{sepconv_forward.1} parent=11 // pred_fallthru
          _
        // Predicated region
        $region29: #{sepconv_forward.1} parent=11 // pred_check
          %p237 = pneg %p147
        $region30: #{sepconv_forward.1} parent=11 // pred_check_branch
          %239 = sbr.rel (%p237) target = $region32
        $region31: #{sepconv_forward.1} parent=11 // pred_region
          %s241 = ssub.s32 16, 16
          %242 = vsyncadd [#allocation7], %s241
          %s244 = sshll.u32 %s5, 4
          %s245 = int_to_ptr.vmem [resolvable:$true] %s244
          %247 = dma.vmem_to_smem %s245, 16, [#allocation8], [#allocation7]
        $region32: #{sepconv_forward.1} parent=11 // pred_fallthru
          _
        // Predicated region
        $region33: #{sepconv_forward.1} parent=11 // pred_check
          %p248 = pneg %p168
        $region34: #{sepconv_forward.1} parent=11 // pred_check_branch
          %250 = sbr.rel (%p248) target = $region36
        $region35: #{sepconv_forward.1} parent=11 // pred_region
          %s252 = ssub.s32 16, 16
          %253 = vsyncadd [#allocation10], %s252
          %s255 = sshll.u32 %s6, 4
          %s256 = int_to_ptr.vmem [resolvable:$true] %s255
          %258 = dma.vmem_to_smem %s256, 16, [#allocation9], [#allocation10]
        $region36: #{sepconv_forward.1} parent=11 // pred_fallthru
          _
      $region12: #{sepconv_forward.1} parent=5 // pred_fallthru
        _
      %p259 = scmp.lt.s32.totalorder %s16, 2
      // Predicated region
      $region37: #{sepconv_forward.1} parent=5 // pred_check
        %p260 = pneg %p259
      $region38: #{sepconv_forward.1} parent=5 // pred_check_branch
        %262 = sbr.rel (%p260) target = $region40
      $region39: #{sepconv_forward.1} parent=5 // pred_region
        // Predicated region
        $region41: #{sepconv_forward.1} parent=39 // pred_check
          %p263 = pneg %p36
        $region42: #{sepconv_forward.1} parent=39 // pred_check_branch
          %265 = sbr.rel (%p263) target = $region44
        $region43: #{sepconv_forward.1} parent=39 // pred_region
          %p266 = scmp.lt.s32.totalorder %s16, 1
          %s267 = scalar_select %p266, %s16, 1
          %s268 = smul.addr %s267, 8
          %s269 = smul.addr %s268, 8
          %s270 = scalar_lea.vmem %s0, %s269
        $region44: #{sepconv_forward.1} parent=39 // pred_fallthru
          _
      $region40: #{sepconv_forward.1} parent=5 // pred_fallthru
        _
      %p271 = scmp.le.s32.totalorder 1, %s16
      %p272 = scmp.lt.s32.totalorder %s16, 3
      %p273 = pnand %p271, %p272
      %p274 = pneg %p273
      // Predicated region
      $region45: #{sepconv_forward.1} parent=5 // pred_check
        _
      $region46: #{sepconv_forward.1} parent=5 // pred_check_branch
        %276 = sbr.rel (%p273) target = $region48
      $region47: #{sepconv_forward.1} parent=5 // pred_region
        %s277 = ssub.s32 %s16, 1
        // Predicated region
        $region49: #{sepconv_forward.1} parent=47 // pred_check
          %p278 = pneg %p84
        $region50: #{sepconv_forward.1} parent=47 // pred_check_branch
          %280 = sbr.rel (%p278) target = $region52
        $region51: #{sepconv_forward.1} parent=47 // pred_region
          %281 = dma.done [#allocation5], 16
        $region52: #{sepconv_forward.1} parent=47 // pred_fallthru
          _
        // Predicated region
        $region53: #{sepconv_forward.1} parent=47 // pred_check
          %p282 = pneg %p105
        $region54: #{sepconv_forward.1} parent=47 // pred_check_branch
          %284 = sbr.rel (%p282) target = $region56
        $region55: #{sepconv_forward.1} parent=47 // pred_region
          %285 = dma.done [#allocation7], 16
        $region56: #{sepconv_forward.1} parent=47 // pred_fallthru
          _
        // Predicated region
        $region57: #{sepconv_forward.1} parent=47 // pred_check
          %p286 = pneg %p147
        $region58: #{sepconv_forward.1} parent=47 // pred_check_branch
          %288 = sbr.rel (%p286) target = $region60
        $region59: #{sepconv_forward.1} parent=47 // pred_region
          %289 = dma.done [#allocation7], 16
        $region60: #{sepconv_forward.1} parent=47 // pred_fallthru
          _
        // Predicated region
        $region61: #{sepconv_forward.1} parent=47 // pred_check
          %p290 = pneg %p168
        $region62: #{sepconv_forward.1} parent=47 // pred_check_branch
          %292 = sbr.rel (%p290) target = $region64
        $region63: #{sepconv_forward.1} parent=47 // pred_region
          %293 = dma.done [#allocation10], 16
        $region64: #{sepconv_forward.1} parent=47 // pred_fallthru
          _
        %294 = sfence
        %p295 = scmp.lt.s32.totalorder %s21, 1
        %s296 = scalar_select %p295, %s21, 1
        %s297 = smul.addr %s296, 8
        %s298 = smul.addr %s297, 8
        %s299 = scalar_lea.vmem %s0, %s298
        %p300 = pneg %p42
        %p301 = pneg %p39
        %p302 = pneg %p63
        %p303 = pneg %p60
        %p304 = pneg %p84
        %p305 = pneg %p81
        %p306 = pneg %p105
        %p307 = pneg %p102
        %p308 = pneg %p126
        %p309 = pneg %p123
        %p310 = pneg %p147
        %p311 = pneg %p144
        %p312 = pneg %p168
        %p313 = pneg %p165
        %p314 = pneg %p194
        %p315 = pneg %p191
        %p316 = scmp.lt.s32.totalorder %s21, 1
        %s317 = scalar_select %p316, %s21, 1
        %s318 = smul.addr %s317, 2
        %s319 = smul.addr %s318, 8
        %s320 = scalar_lea.vmem %s7, %s319
        %p321 = scmp.lt.s32.totalorder %s21, 1
        %s322 = scalar_select %p321, %s21, 1
        %s323 = smul.addr %s322, 8
        %s324 = smul.addr %s323, 8
        %s325 = scalar_lea.vmem %s0, %s324
        %p326 = scmp.lt.s32.totalorder %s21, 1
        %s327 = scalar_select %p326, %s21, 1
        %s328 = smul.addr %s327, 2
        %s329 = smul.addr %s328, 8
        %s330 = scalar_lea.vmem %s7, %s329
        %vm331 = vcmask 605184
        %332 = vst.msk [vmem:[#allocation2] sm:$0xff] %vm331, 0.0
        %333 = vst.msk [vmem:[#allocation2 + $0x8] sm:$0xff] %vm331, 0.0
        %vm334 = vcmask 599040
        %335 = vst.msk [vmem:[#allocation2 + $0x10] sm:$0x3] %vm334, 0.0
        %336 = vst.msk [vmem:[#allocation3] sm:$0xff] %vm331, 0.0
        %337 = vst.msk [vmem:[#allocation3 + $0x8] sm:$0xff] %vm331, 0.0
        %338 = vst.msk [vmem:[#allocation3 + $0x10] sm:$0x3] %vm334, 0.0
        %v339 = vld [vmem:[%s1] sm:$0xff]
        %v340 = vld [vmem:[%s1 + $0x8] sm:$0x1]
        %v341 = vld [vmem:[%s4] sm:$0xff]
        %v342 = vld [vmem:[%s4 + $0x8] sm:$0x1]
        %v343 = vld [vmem:[%s325] sm:$0xff]
        %v344 = vld [vmem:[%s325 + $0x8] sm:$0xff]
        %v345 = vmax.f32 %v343, 0.0
        %v346 = vmax.f32 %v344, 0.0
        %349 = vrot.lane.b32.xlu0 %v345, 1
        %v350 = vpop.permute.xlu0 %349
        %351 = vrot.lane.b32.xlu0 %v346, 1
        %v352 = vpop.permute.xlu0 %351
        %vm355 = vcmask 138248
        %356 = vst.msk [vmem:[#allocation2 + $0x1] sm:$0xff] %vm355, %v350
        %357 = vst.msk [vmem:[#allocation2 + $0x9] sm:$0xff] %vm355, %v352
        %s358 = scalar_lea.vmem %s325, 16
        %v359 = vld [vmem:[%s358] sm:$0xff]
        %v360 = vld [vmem:[%s358 + $0x8] sm:$0xff]
        %v361 = vmax.f32 %v359, 0.0
        %v362 = vmax.f32 %v360, 0.0
        %365 = vrot.lane.b32.xlu0 %v361, 19
        %v366 = vpop.permute.xlu0 %365
        %367 = vrot.lane.b32.xlu0 %v362, 19
        %v368 = vpop.permute.xlu0 %367
        %vm371 = vcmask 285848
        %372 = vst.msk [vmem:[#allocation2 + $0x1] sm:$0xff] %vm371, %v366
        %373 = vst.msk [vmem:[#allocation2 + $0x9] sm:$0xff] %vm371, %v368
        %s374 = scalar_lea.vmem %s325, 32
        %v375 = vld [vmem:[%s374] sm:$0xff]
        %v376 = vld [vmem:[%s374 + $0x8] sm:$0xff]
        %v377 = vmax.f32 %v375, 0.0
        %v378 = vmax.f32 %v376, 0.0
        %381 = vrot.lane.b32.xlu0 %v377, 37
        %v382 = vpop.permute.xlu0 %381
        %383 = vrot.lane.b32.xlu0 %v378, 37
        %v384 = vpop.permute.xlu0 %383
        %vm387 = vcmask 433448
        %388 = vst.msk [vmem:[#allocation2 + $0x1] sm:$0xff] %vm387, %v382
        %389 = vst.msk [vmem:[#allocation2 + $0x9] sm:$0xff] %vm387, %v384
        %s390 = scalar_lea.vmem %s325, 48
        %v391 = vld [vmem:[%s390] sm:$0xff]
        %v392 = vld [vmem:[%s390 + $0x8] sm:$0xff]
        %v393 = vmax.f32 %v391, 0.0
        %v394 = vmax.f32 %v392, 0.0
        %397 = vrot.lane.b32.xlu0 %v393, 55
        %v398 = vpop.permute.xlu0 %397
        %399 = vrot.lane.b32.xlu0 %v394, 55
        %v400 = vpop.permute.xlu0 %399
        %vm403 = vcmask 581048
        %404 = vst.msk [vmem:[#allocation2 + $0x1] sm:$0xff] %vm403, %v398
        %405 = vst.msk [vmem:[#allocation2 + $0x9] sm:$0xff] %vm403, %v400
        %v406 = vld [vmem:[#allocation2] sm:$0xff]
        %v407 = vld [vmem:[#allocation2 + $0x8] sm:$0xff]
        %v408 = vld [vmem:[#allocation2 + $0x10] sm:$0x3]
        %v409 = vlaneseq
        %v410 = vshrl.u32 %v409, 7
        %v411 = vsub.s32 0, %v410
        %v412 = vrot.slane %v339, %v411
        %v413 = vmul.f32 %v406, %v412
        %v414 = vmul.f32 %v407, %v412
        %v415 = vlaneseq
        %v416 = vshrl.u32 %v415, 7
        %v417 = vsub.s32 1, %v416
        %v418 = vrot.slane %v339, %v417
        %420 = vrot.lane.b32.xlu0 %v418, 1
        %v421 = vpop.permute.xlu0 %420
        %v423 = vmul.f32 %v406, %v421
        %v424 = vmul.f32 %v407, %v421
        %427 = vrot.lane.b32.xlu0 %v423, 127
        %v428 = vpop.permute.xlu0 %427
        %429 = vrot.lane.b32.xlu0 %v424, 127
        %v430 = vpop.permute.xlu0 %429
        %v433 = vadd.f32 %v413, %v428
        %v434 = vadd.f32 %v414, %v430
        %v435 = vlaneseq
        %v436 = vshrl.u32 %v435, 7
        %v437 = vsub.s32 2, %v436
        %v438 = vrot.slane %v339, %v437
        %440 = vrot.lane.b32.xlu0 %v438, 2
        %v441 = vpop.permute.xlu0 %440
        %v443 = vmul.f32 %v406, %v441
        %v444 = vmul.f32 %v407, %v441
        %447 = vrot.lane.b32.xlu0 %v443, 126
        %v448 = vpop.permute.xlu0 %447
        %449 = vrot.lane.b32.xlu0 %v444, 126
        %v450 = vpop.permute.xlu0 %449
        %v453 = vadd.f32 %v433, %v448
        %v454 = vadd.f32 %v434, %v450
        %v455 = vlaneseq
        %v456 = vshrl.u32 %v455, 7
        %v457 = vsub.s32 3, %v456
        %v458 = vrot.slane %v339, %v457
        %v459 = vmul.f32 %v406, %v458
        %v460 = vmul.f32 %v407, %v458
        %v461 = vmul.f32 %v408, %v458
        %vm465 = vcmask 1046528
        %v466 = vrot.slane %v459, 1
        %v467 = vrot.slane %v460, 1
        %v468 = vsel %vm465, %v466, %v467
        %v469 = vrot.slane %v461, 1
        %v470 = vsel %vm465, %v467, %v469
        %v473 = vadd.f32 %v453, %v468
        %v474 = vadd.f32 %v454, %v470
        %v475 = vlaneseq
        %v476 = vshrl.u32 %v475, 7
        %v477 = vsub.s32 4, %v476
        %v478 = vrot.slane %v339, %v477
        %480 = vrot.lane.b32.xlu0 %v478, 1
        %v481 = vpop.permute.xlu0 %480
        %v483 = vmul.f32 %v406, %v481
        %v484 = vmul.f32 %v407, %v481
        %v485 = vmul.f32 %v408, %v481
        %v489 = vrot.slane %v483, 1
        %v490 = vrot.slane %v484, 1
        %v491 = vsel %vm465, %v489, %v490
        %v492 = vrot.slane %v485, 1
        %v493 = vsel %vm465, %v490, %v492
        %494 = vrot.lane.b32.xlu0 %v491, 127
        %v495 = vpop.permute.xlu0 %494
        %496 = vrot.lane.b32.xlu0 %v493, 127
        %v497 = vpop.permute.xlu0 %496
        %v500 = vadd.f32 %v473, %v495
        %v501 = vadd.f32 %v474, %v497
        %v502 = vlaneseq
        %v503 = vshrl.u32 %v502, 7
        %v504 = vsub.s32 5, %v503
        %v505 = vrot.slane %v339, %v504
        %507 = vrot.lane.b32.xlu0 %v505, 2
        %v508 = vpop.permute.xlu0 %507
        %v510 = vmul.f32 %v406, %v508
        %v511 = vmul.f32 %v407, %v508
        %v512 = vmul.f32 %v408, %v508
        %v516 = vrot.slane %v510, 1
        %v517 = vrot.slane %v511, 1
        %v518 = vsel %vm465, %v516, %v517
        %v519 = vrot.slane %v512, 1
        %v520 = vsel %vm465, %v517, %v519
        %521 = vrot.lane.b32.xlu0 %v518, 126
        %v522 = vpop.permute.xlu0 %521
        %523 = vrot.lane.b32.xlu0 %v520, 126
        %v524 = vpop.permute.xlu0 %523
        %v527 = vadd.f32 %v500, %v522
        %v528 = vadd.f32 %v501, %v524
        %v529 = vlaneseq
        %v530 = vshrl.u32 %v529, 7
        %v531 = vsub.s32 6, %v530
        %v532 = vrot.slane %v339, %v531
        %v533 = vmul.f32 %v406, %v532
        %v534 = vmul.f32 %v407, %v532
        %v535 = vmul.f32 %v408, %v532
        %vm539 = vcmask 1045504
        %v540 = vrot.slane %v533, 2
        %v541 = vrot.slane %v534, 2
        %v542 = vsel %vm539, %v540, %v541
        %v543 = vrot.slane %v535, 2
        %v544 = vsel %vm539, %v541, %v543
        %v547 = vadd.f32 %v527, %v542
        %v548 = vadd.f32 %v528, %v544
        %v549 = vlaneseq
        %v550 = vshrl.u32 %v549, 7
        %v551 = vsub.s32 7, %v550
        %v552 = vrot.slane %v339, %v551
        %554 = vrot.lane.b32.xlu0 %v552, 1
        %v555 = vpop.permute.xlu0 %554
        %v557 = vmul.f32 %v406, %v555
        %v558 = vmul.f32 %v407, %v555
        %v559 = vmul.f32 %v408, %v555
        %v563 = vrot.slane %v557, 2
        %v564 = vrot.slane %v558, 2
        %v565 = vsel %vm539, %v563, %v564
        %v566 = vrot.slane %v559, 2
        %v567 = vsel %vm539, %v564, %v566
        %568 = vrot.lane.b32.xlu0 %v565, 127
        %v569 = vpop.permute.xlu0 %568
        %570 = vrot.lane.b32.xlu0 %v567, 127
        %v571 = vpop.permute.xlu0 %570
        %v574 = vadd.f32 %v547, %v569
        %v575 = vadd.f32 %v548, %v571
        %v576 = vlaneseq
        %v577 = vshrl.u32 %v576, 7
        %v578 = vsub.s32 0, %v577
        %v579 = vrot.slane %v340, %v578
        %581 = vrot.lane.b32.xlu0 %v579, 2
        %v582 = vpop.permute.xlu0 %581
        %v584 = vmul.f32 %v406, %v582
        %v585 = vmul.f32 %v407, %v582
        %v586 = vmul.f32 %v408, %v582
        %v590 = vrot.slane %v584, 2
        %v591 = vrot.slane %v585, 2
        %v592 = vsel %vm539, %v590, %v591
        %v593 = vrot.slane %v586, 2
        %v594 = vsel %vm539, %v591, %v593
        %595 = vrot.lane.b32.xlu0 %v592, 126
        %v596 = vpop.permute.xlu0 %595
        %597 = vrot.lane.b32.xlu0 %v594, 126
        %v598 = vpop.permute.xlu0 %597
        %v601 = vadd.f32 %v574, %v596
        %v602 = vadd.f32 %v575, %v598
        %s603 = sld [smem:[#allocation4]]
        %v604 = vstv %s603
        %v605 = vmul.f32 %v601, %v604
        %v606 = vmul.f32 %v602, %v604
        %s607 = sld [smem:[#allocation4 + $0x4]]
        %v608 = vstv %s607
        %v609 = vmul.f32 %v601, %v608
        %v610 = vmul.f32 %v602, %v608
        %613 = vrot.lane.b32.xlu0 %v609, 110
        %v614 = vpop.permute.xlu0 %613
        %615 = vrot.lane.b32.xlu0 %v610, 110
        %v616 = vpop.permute.xlu0 %615
        %v619 = vadd.f32 %v605, %v614
        %v620 = vadd.f32 %v606, %v616
        %s621 = sld [smem:[#allocation4 + $0x8]]
        %v622 = vstv %s621
        %v623 = vmul.f32 %v601, %v622
        %v624 = vmul.f32 %v602, %v622
        %627 = vrot.lane.b32.xlu0 %v623, 92
        %v628 = vpop.permute.xlu0 %627
        %629 = vrot.lane.b32.xlu0 %v624, 92
        %v630 = vpop.permute.xlu0 %629
        %v633 = vadd.f32 %v619, %v628
        %v634 = vadd.f32 %v620, %v630
        %s635 = sld [smem:[#allocation4 + $0xc]]
        %v636 = vstv %s635
        %v637 = vmul.f32 %v601, %v636
        %v638 = vmul.f32 %v602, %v636
        %641 = vrot.lane.b32.xlu0 %v637, 74
        %v642 = vpop.permute.xlu0 %641
        %643 = vrot.lane.b32.xlu0 %v638, 74
        %v644 = vpop.permute.xlu0 %643
        %v647 = vadd.f32 %v633, %v642
        %v648 = vadd.f32 %v634, %v644
        %s649 = sld [smem:[#allocation6]]
        %v650 = vstv %s649
        %v651 = vadd.f32 %v647, %v650
        %v652 = vadd.f32 %v648, %v650
        %v653 = vmax.f32 %v651, 0.0
        %v654 = vmax.f32 %v652, 0.0
        %657 = vrot.lane.b32.xlu0 %v653, 1
        %v658 = vpop.permute.xlu0 %657
        %659 = vrot.lane.b32.xlu0 %v654, 1
        %v660 = vpop.permute.xlu0 %659
        %663 = vst.msk [vmem:[#allocation3 + $0x1] sm:$0xff] %vm355, %v658
        %664 = vst.msk [vmem:[#allocation3 + $0x9] sm:$0xff] %vm355, %v660
        %s665 = sld [smem:[#allocation4 + $0x1]]
        %v666 = vstv %s665
        %v667 = vmul.f32 %v601, %v666
        %v668 = vmul.f32 %v602, %v666
        %s669 = sld [smem:[#allocation4 + $0x5]]
        %v670 = vstv %s669
        %v671 = vmul.f32 %v601, %v670
        %v672 = vmul.f32 %v602, %v670
        %675 = vrot.lane.b32.xlu0 %v671, 110
        %v676 = vpop.permute.xlu0 %675
        %677 = vrot.lane.b32.xlu0 %v672, 110
        %v678 = vpop.permute.xlu0 %677
        %v681 = vadd.f32 %v667, %v676
        %v682 = vadd.f32 %v668, %v678
        %s683 = sld [smem:[#allocation4 + $0x9]]
        %v684 = vstv %s683
        %v685 = vmul.f32 %v601, %v684
        %v686 = vmul.f32 %v602, %v684
        %689 = vrot.lane.b32.xlu0 %v685, 92
        %v690 = vpop.permute.xlu0 %689
        %691 = vrot.lane.b32.xlu0 %v686, 92
        %v692 = vpop.permute.xlu0 %691
        %v695 = vadd.f32 %v681, %v690
        %v696 = vadd.f32 %v682, %v692
        %s697 = sld [smem:[#allocation4 + $0xd]]
        %v698 = vstv %s697
        %v699 = vmul.f32 %v601, %v698
        %v700 = vmul.f32 %v602, %v698
        %703 = vrot.lane.b32.xlu0 %v699, 74
        %v704 = vpop.permute.xlu0 %703
        %705 = vrot.lane.b32.xlu0 %v700, 74
        %v706 = vpop.permute.xlu0 %705
        %v709 = vadd.f32 %v695, %v704
        %v710 = vadd.f32 %v696, %v706
        %s711 = sld [smem:[#allocation6 + $0x1]]
        %v712 = vstv %s711
        %v713 = vadd.f32 %v709, %v712
        %v714 = vadd.f32 %v710, %v712
        %v715 = vmax.f32 %v713, 0.0
        %v716 = vmax.f32 %v714, 0.0
        %719 = vrot.lane.b32.xlu0 %v715, 19
        %v720 = vpop.permute.xlu0 %719
        %721 = vrot.lane.b32.xlu0 %v716, 19
        %v722 = vpop.permute.xlu0 %721
        %725 = vst.msk [vmem:[#allocation3 + $0x1] sm:$0xff] %vm371, %v720
        %726 = vst.msk [vmem:[#allocation3 + $0x9] sm:$0xff] %vm371, %v722
        %s727 = sld [smem:[#allocation4 + $0x2]]
        %v728 = vstv %s727
        %v729 = vmul.f32 %v601, %v728
        %v730 = vmul.f32 %v602, %v728
        %s731 = sld [smem:[#allocation4 + $0x6]]
        %v732 = vstv %s731
        %v733 = vmul.f32 %v601, %v732
        %v734 = vmul.f32 %v602, %v732
        %737 = vrot.lane.b32.xlu0 %v733, 110
        %v738 = vpop.permute.xlu0 %737
        %739 = vrot.lane.b32.xlu0 %v734, 110
        %v740 = vpop.permute.xlu0 %739
        %v743 = vadd.f32 %v729, %v738
        %v744 = vadd.f32 %v730, %v740
        %s745 = sld [smem:[#allocation4 + $0xa]]
        %v746 = vstv %s745
        %v747 = vmul.f32 %v601, %v746
        %v748 = vmul.f32 %v602, %v746
        %751 = vrot.lane.b32.xlu0 %v747, 92
        %v752 = vpop.permute.xlu0 %751
        %753 = vrot.lane.b32.xlu0 %v748, 92
        %v754 = vpop.permute.xlu0 %753
        %v757 = vadd.f32 %v743, %v752
        %v758 = vadd.f32 %v744, %v754
        %s759 = sld [smem:[#allocation4 + $0xe]]
        %v760 = vstv %s759
        %v761 = vmul.f32 %v601, %v760
        %v762 = vmul.f32 %v602, %v760
        %765 = vrot.lane.b32.xlu0 %v761, 74
        %v766 = vpop.permute.xlu0 %765
        %767 = vrot.lane.b32.xlu0 %v762, 74
        %v768 = vpop.permute.xlu0 %767
        %v771 = vadd.f32 %v757, %v766
        %v772 = vadd.f32 %v758, %v768
        %s773 = sld [smem:[#allocation6 + $0x2]]
        %v774 = vstv %s773
        %v775 = vadd.f32 %v771, %v774
        %v776 = vadd.f32 %v772, %v774
        %v777 = vmax.f32 %v775, 0.0
        %v778 = vmax.f32 %v776, 0.0
        %781 = vrot.lane.b32.xlu0 %v777, 37
        %v782 = vpop.permute.xlu0 %781
        %783 = vrot.lane.b32.xlu0 %v778, 37
        %v784 = vpop.permute.xlu0 %783
        %787 = vst.msk [vmem:[#allocation3 + $0x1] sm:$0xff] %vm387, %v782
        %788 = vst.msk [vmem:[#allocation3 + $0x9] sm:$0xff] %vm387, %v784
        %s789 = sld [smem:[#allocation4 + $0x3]]
        %v790 = vstv %s789
        %v791 = vmul.f32 %v601, %v790
        %v792 = vmul.f32 %v602, %v790
        %s793 = sld [smem:[#allocation4 + $0x7]]
        %v794 = vstv %s793
        %v795 = vmul.f32 %v601, %v794
        %v796 = vmul.f32 %v602, %v794
        %799 = vrot.lane.b32.xlu0 %v795, 110
        %v800 = vpop.permute.xlu0 %799
        %801 = vrot.lane.b32.xlu0 %v796, 110
        %v802 = vpop.permute.xlu0 %801
        %v805 = vadd.f32 %v791, %v800
        %v806 = vadd.f32 %v792, %v802
        %s807 = sld [smem:[#allocation4 + $0xb]]
        %v808 = vstv %s807
        %v809 = vmul.f32 %v601, %v808
        %v810 = vmul.f32 %v602, %v808
        %813 = vrot.lane.b32.xlu0 %v809, 92
        %v814 = vpop.permute.xlu0 %813
        %815 = vrot.lane.b32.xlu0 %v810, 92
        %v816 = vpop.permute.xlu0 %815
        %v819 = vadd.f32 %v805, %v814
        %v820 = vadd.f32 %v806, %v816
        %s821 = sld [smem:[#allocation4 + $0xf]]
        %v822 = vstv %s821
        %v823 = vmul.f32 %v601, %v822
        %v824 = vmul.f32 %v602, %v822
        %827 = vrot.lane.b32.xlu0 %v823, 74
        %v828 = vpop.permute.xlu0 %827
        %829 = vrot.lane.b32.xlu0 %v824, 74
        %v830 = vpop.permute.xlu0 %829
        %v833 = vadd.f32 %v819, %v828
        %v834 = vadd.f32 %v820, %v830
        %s835 = sld [smem:[#allocation6 + $0x3]]
        %v836 = vstv %s835
        %v837 = vadd.f32 %v833, %v836
        %v838 = vadd.f32 %v834, %v836
        %v839 = vmax.f32 %v837, 0.0
        %v840 = vmax.f32 %v838, 0.0
        %843 = vrot.lane.b32.xlu0 %v839, 55
        %v844 = vpop.permute.xlu0 %843
        %845 = vrot.lane.b32.xlu0 %v840, 55
        %v846 = vpop.permute.xlu0 %845
        %849 = vst.msk [vmem:[#allocation3 + $0x1] sm:$0xff] %vm403, %v844
        %850 = vst.msk [vmem:[#allocation3 + $0x9] sm:$0xff] %vm403, %v846
        %v851 = vld [vmem:[#allocation3] sm:$0xff]
        %v852 = vld [vmem:[#allocation3 + $0x8] sm:$0xff]
        %v853 = vld [vmem:[#allocation3 + $0x10] sm:$0x3]
        %v854 = vlaneseq
        %v855 = vshrl.u32 %v854, 7
        %v856 = vsub.s32 0, %v855
        %v857 = vrot.slane %v341, %v856
        %v858 = vmul.f32 %v851, %v857
        %v859 = vmul.f32 %v852, %v857
        %v860 = vlaneseq
        %v861 = vshrl.u32 %v860, 7
        %v862 = vsub.s32 1, %v861
        %v863 = vrot.slane %v341, %v862
        %865 = vrot.lane.b32.xlu0 %v863, 1
        %v866 = vpop.permute.xlu0 %865
        %v868 = vmul.f32 %v851, %v866
        %v869 = vmul.f32 %v852, %v866
        %872 = vrot.lane.b32.xlu0 %v868, 127
        %v873 = vpop.permute.xlu0 %872
        %874 = vrot.lane.b32.xlu0 %v869, 127
        %v875 = vpop.permute.xlu0 %874
        %v878 = vadd.f32 %v858, %v873
        %v879 = vadd.f32 %v859, %v875
        %v880 = vlaneseq
        %v881 = vshrl.u32 %v880, 7
        %v882 = vsub.s32 2, %v881
        %v883 = vrot.slane %v341, %v882
        %885 = vrot.lane.b32.xlu0 %v883, 2
        %v886 = vpop.permute.xlu0 %885
        %v888 = vmul.f32 %v851, %v886
        %v889 = vmul.f32 %v852, %v886
        %892 = vrot.lane.b32.xlu0 %v888, 126
        %v893 = vpop.permute.xlu0 %892
        %894 = vrot.lane.b32.xlu0 %v889, 126
        %v895 = vpop.permute.xlu0 %894
        %v898 = vadd.f32 %v878, %v893
        %v899 = vadd.f32 %v879, %v895
        %v900 = vlaneseq
        %v901 = vshrl.u32 %v900, 7
        %v902 = vsub.s32 3, %v901
        %v903 = vrot.slane %v341, %v902
        %v904 = vmul.f32 %v851, %v903
        %v905 = vmul.f32 %v852, %v903
        %v906 = vmul.f32 %v853, %v903
        %v910 = vrot.slane %v904, 1
        %v911 = vrot.slane %v905, 1
        %v912 = vsel %vm465, %v910, %v911
        %v913 = vrot.slane %v906, 1
        %v914 = vsel %vm465, %v911, %v913
        %v917 = vadd.f32 %v898, %v912
        %v918 = vadd.f32 %v899, %v914
        %v919 = vlaneseq
        %v920 = vshrl.u32 %v919, 7
        %v921 = vsub.s32 4, %v920
        %v922 = vrot.slane %v341, %v921
        %924 = vrot.lane.b32.xlu0 %v922, 1
        %v925 = vpop.permute.xlu0 %924
        %v927 = vmul.f32 %v851, %v925
        %v928 = vmul.f32 %v852, %v925
        %v929 = vmul.f32 %v853, %v925
        %v933 = vrot.slane %v927, 1
        %v934 = vrot.slane %v928, 1
        %v935 = vsel %vm465, %v933, %v934
        %v936 = vrot.slane %v929, 1
        %v937 = vsel %vm465, %v934, %v936
        %938 = vrot.lane.b32.xlu0 %v935, 127
        %v939 = vpop.permute.xlu0 %938
        %940 = vrot.lane.b32.xlu0 %v937, 127
        %v941 = vpop.permute.xlu0 %940
        %v944 = vadd.f32 %v917, %v939
        %v945 = vadd.f32 %v918, %v941
        %v946 = vlaneseq
        %v947 = vshrl.u32 %v946, 7
        %v948 = vsub.s32 5, %v947
        %v949 = vrot.slane %v341, %v948
        %951 = vrot.lane.b32.xlu0 %v949, 2
        %v952 = vpop.permute.xlu0 %951
        %v954 = vmul.f32 %v851, %v952
        %v955 = vmul.f32 %v852, %v952
        %v956 = vmul.f32 %v853, %v952
        %v960 = vrot.slane %v954, 1
        %v961 = vrot.slane %v955, 1
        %v962 = vsel %vm465, %v960, %v961
        %v963 = vrot.slane %v956, 1
        %v964 = vsel %vm465, %v961, %v963
        %965 = vrot.lane.b32.xlu0 %v962, 126
        %v966 = vpop.permute.xlu0 %965
        %967 = vrot.lane.b32.xlu0 %v964, 126
        %v968 = vpop.permute.xlu0 %967
        %v971 = vadd.f32 %v944, %v966
        %v972 = vadd.f32 %v945, %v968
        %v973 = vlaneseq
        %v974 = vshrl.u32 %v973, 7
        %v975 = vsub.s32 6, %v974
        %v976 = vrot.slane %v341, %v975
        %v977 = vmul.f32 %v851, %v976
        %v978 = vmul.f32 %v852, %v976
        %v979 = vmul.f32 %v853, %v976
        %v983 = vrot.slane %v977, 2
        %v984 = vrot.slane %v978, 2
        %v985 = vsel %vm539, %v983, %v984
        %v986 = vrot.slane %v979, 2
        %v987 = vsel %vm539, %v984, %v986
        %v990 = vadd.f32 %v971, %v985
        %v991 = vadd.f32 %v972, %v987
        %v992 = vlaneseq
        %v993 = vshrl.u32 %v992, 7
        %v994 = vsub.s32 7, %v993
        %v995 = vrot.slane %v341, %v994
        %997 = vrot.lane.b32.xlu0 %v995, 1
        %v998 = vpop.permute.xlu0 %997
        %v1000 = vmul.f32 %v851, %v998
        %v1001 = vmul.f32 %v852, %v998
        %v1002 = vmul.f32 %v853, %v998
        %v1006 = vrot.slane %v1000, 2
        %v1007 = vrot.slane %v1001, 2
        %v1008 = vsel %vm539, %v1006, %v1007
        %v1009 = vrot.slane %v1002, 2
        %v1010 = vsel %vm539, %v1007, %v1009
        %1011 = vrot.lane.b32.xlu0 %v1008, 127
        %v1012 = vpop.permute.xlu0 %1011
        %1013 = vrot.lane.b32.xlu0 %v1010, 127
        %v1014 = vpop.permute.xlu0 %1013
        %v1017 = vadd.f32 %v990, %v1012
        %v1018 = vadd.f32 %v991, %v1014
        %v1019 = vlaneseq
        %v1020 = vshrl.u32 %v1019, 7
        %v1021 = vsub.s32 0, %v1020
        %v1022 = vrot.slane %v342, %v1021
        %1024 = vrot.lane.b32.xlu0 %v1022, 2
        %v1025 = vpop.permute.xlu0 %1024
        %v1027 = vmul.f32 %v851, %v1025
        %v1028 = vmul.f32 %v852, %v1025
        %v1029 = vmul.f32 %v853, %v1025
        %v1033 = vrot.slane %v1027, 2
        %v1034 = vrot.slane %v1028, 2
        %v1035 = vsel %vm539, %v1033, %v1034
        %v1036 = vrot.slane %v1029, 2
        %v1037 = vsel %vm539, %v1034, %v1036
        %1038 = vrot.lane.b32.xlu0 %v1035, 126
        %v1039 = vpop.permute.xlu0 %1038
        %1040 = vrot.lane.b32.xlu0 %v1037, 126
        %v1041 = vpop.permute.xlu0 %1040
        %v1044 = vadd.f32 %v1017, %v1039
        %v1045 = vadd.f32 %v1018, %v1041
        %s1046 = sld [smem:[#allocation8]]
        %v1047 = vstv %s1046
        %v1048 = vmul.f32 %v1044, %v1047
        %v1049 = vmul.f32 %v1045, %v1047
        %s1050 = sld [smem:[#allocation8 + $0x8]]
        %v1051 = vstv %s1050
        %v1052 = vmul.f32 %v1044, %v1051
        %v1053 = vmul.f32 %v1045, %v1051
        %1056 = vrot.lane.b32.xlu0 %v1052, 110
        %v1057 = vpop.permute.xlu0 %1056
        %1058 = vrot.lane.b32.xlu0 %v1053, 110
        %v1059 = vpop.permute.xlu0 %1058
        %v1062 = vadd.f32 %v1048, %v1057
        %v1063 = vadd.f32 %v1049, %v1059
        %s1064 = sld [smem:[#allocation8 + $0x10]]
        %v1065 = vstv %s1064
        %v1066 = vmul.f32 %v1044, %v1065
        %v1067 = vmul.f32 %v1045, %v1065
        %1070 = vrot.lane.b32.xlu0 %v1066, 92
        %v1071 = vpop.permute.xlu0 %1070
        %1072 = vrot.lane.b32.xlu0 %v1067, 92
        %v1073 = vpop.permute.xlu0 %1072
        %v1076 = vadd.f32 %v1062, %v1071
        %v1077 = vadd.f32 %v1063, %v1073
        %s1078 = sld [smem:[#allocation8 + $0x18]]
        %v1079 = vstv %s1078
        %v1080 = vmul.f32 %v1044, %v1079
        %v1081 = vmul.f32 %v1045, %v1079
        %1084 = vrot.lane.b32.xlu0 %v1080, 74
        %v1085 = vpop.permute.xlu0 %1084
        %1086 = vrot.lane.b32.xlu0 %v1081, 74
        %v1087 = vpop.permute.xlu0 %1086
        %v1090 = vadd.f32 %v1076, %v1085
        %v1091 = vadd.f32 %v1077, %v1087
        %s1092 = sld [smem:[#allocation9]]
        %v1093 = vstv %s1092
        %v1094 = vadd.f32 %v1090, %v1093
        %v1095 = vadd.f32 %v1091, %v1093
        %vm1096 = vcmask 130048
        %1097 = vst.msk [vmem:[%s330] sm:$0xff] %vm1096, %v1094
        %1098 = vst.msk [vmem:[%s330 + $0x8] sm:$0xff] %vm1096, %v1095
        %s1099 = sld [smem:[#allocation8 + $0x1]]
        %v1100 = vstv %s1099
        %v1101 = vmul.f32 %v1044, %v1100
        %v1102 = vmul.f32 %v1045, %v1100
        %s1103 = sld [smem:[#allocation8 + $0x9]]
        %v1104 = vstv %s1103
        %v1105 = vmul.f32 %v1044, %v1104
        %v1106 = vmul.f32 %v1045, %v1104
        %1109 = vrot.lane.b32.xlu0 %v1105, 110
        %v1110 = vpop.permute.xlu0 %1109
        %1111 = vrot.lane.b32.xlu0 %v1106, 110
        %v1112 = vpop.permute.xlu0 %1111
        %v1115 = vadd.f32 %v1101, %v1110
        %v1116 = vadd.f32 %v1102, %v1112
        %s1117 = sld [smem:[#allocation8 + $0x11]]
        %v1118 = vstv %s1117
        %v1119 = vmul.f32 %v1044, %v1118
        %v1120 = vmul.f32 %v1045, %v1118
        %1123 = vrot.lane.b32.xlu0 %v1119, 92
        %v1124 = vpop.permute.xlu0 %1123
        %1125 = vrot.lane.b32.xlu0 %v1120, 92
        %v1126 = vpop.permute.xlu0 %1125
        %v1129 = vadd.f32 %v1115, %v1124
        %v1130 = vadd.f32 %v1116, %v1126
        %s1131 = sld [smem:[#allocation8 + $0x19]]
        %v1132 = vstv %s1131
        %v1133 = vmul.f32 %v1044, %v1132
        %v1134 = vmul.f32 %v1045, %v1132
        %1137 = vrot.lane.b32.xlu0 %v1133, 74
        %v1138 = vpop.permute.xlu0 %1137
        %1139 = vrot.lane.b32.xlu0 %v1134, 74
        %v1140 = vpop.permute.xlu0 %1139
        %v1143 = vadd.f32 %v1129, %v1138
        %v1144 = vadd.f32 %v1130, %v1140
        %s1145 = sld [smem:[#allocation9 + $0x1]]
        %v1146 = vstv %s1145
        %v1147 = vadd.f32 %v1143, %v1146
        %v1148 = vadd.f32 %v1144, %v1146
        %1151 = vrot.lane.b32.xlu0 %v1147, 16
        %v1152 = vpop.permute.xlu0 %1151
        %1153 = vrot.lane.b32.xlu0 %v1148, 16
        %v1154 = vpop.permute.xlu0 %1153
        %vm1157 = vcmask 261248
        %1158 = vst.msk [vmem:[%s330] sm:$0xff] %vm1157, %v1152
        %1159 = vst.msk [vmem:[%s330 + $0x8] sm:$0xff] %vm1157, %v1154
        %s1160 = sld [smem:[#allocation8 + $0x2]]
        %v1161 = vstv %s1160
        %v1162 = vmul.f32 %v1044, %v1161
        %v1163 = vmul.f32 %v1045, %v1161
        %s1164 = sld [smem:[#allocation8 + $0xa]]
        %v1165 = vstv %s1164
        %v1166 = vmul.f32 %v1044, %v1165
        %v1167 = vmul.f32 %v1045, %v1165
        %1170 = vrot.lane.b32.xlu0 %v1166, 110
        %v1171 = vpop.permute.xlu0 %1170
        %1172 = vrot.lane.b32.xlu0 %v1167, 110
        %v1173 = vpop.permute.xlu0 %1172
        %v1176 = vadd.f32 %v1162, %v1171
        %v1177 = vadd.f32 %v1163, %v1173
        %s1178 = sld [smem:[#allocation8 + $0x12]]
        %v1179 = vstv %s1178
        %v1180 = vmul.f32 %v1044, %v1179
        %v1181 = vmul.f32 %v1045, %v1179
        %1184 = vrot.lane.b32.xlu0 %v1180, 92
        %v1185 = vpop.permute.xlu0 %1184
        %1186 = vrot.lane.b32.xlu0 %v1181, 92
        %v1187 = vpop.permute.xlu0 %1186
        %v1190 = vadd.f32 %v1176, %v1185
        %v1191 = vadd.f32 %v1177, %v1187
        %s1192 = sld [smem:[#allocation8 + $0x1a]]
        %v1193 = vstv %s1192
        %v1194 = vmul.f32 %v1044, %v1193
        %v1195 = vmul.f32 %v1045, %v1193
        %1198 = vrot.lane.b32.xlu0 %v1194, 74
        %v1199 = vpop.permute.xlu0 %1198
        %1200 = vrot.lane.b32.xlu0 %v1195, 74
        %v1201 = vpop.permute.xlu0 %1200
        %v1204 = vadd.f32 %v1190, %v1199
        %v1205 = vadd.f32 %v1191, %v1201
        %s1206 = sld [smem:[#allocation9 + $0x2]]
        %v1207 = vstv %s1206
        %v1208 = vadd.f32 %v1204, %v1207
        %v1209 = vadd.f32 %v1205, %v1207
        %1212 = vrot.lane.b32.xlu0 %v1208, 32
        %v1213 = vpop.permute.xlu0 %1212
        %1214 = vrot.lane.b32.xlu0 %v1209, 32
        %v1215 = vpop.permute.xlu0 %1214
        %vm1218 = vcmask 392448
        %1219 = vst.msk [vmem:[%s330] sm:$0xff] %vm1218, %v1213
        %1220 = vst.msk [vmem:[%s330 + $0x8] sm:$0xff] %vm1218, %v1215
        %s1221 = sld [smem:[#allocation8 + $0x3]]
        %v1222 = vstv %s1221
        %v1223 = vmul.f32 %v1044, %v1222
        %v1224 = vmul.f32 %v1045, %v1222
        %s1225 = sld [smem:[#allocation8 + $0xb]]
        %v1226 = vstv %s1225
        %v1227 = vmul.f32 %v1044, %v1226
        %v1228 = vmul.f32 %v1045, %v1226
        %1231 = vrot.lane.b32.xlu0 %v1227, 110
        %v1232 = vpop.permute.xlu0 %1231
        %1233 = vrot.lane.b32.xlu0 %v1228, 110
        %v1234 = vpop.permute.xlu0 %1233
        %v1237 = vadd.f32 %v1223, %v1232
        %v1238 = vadd.f32 %v1224, %v1234
        %s1239 = sld [smem:[#allocation8 + $0x13]]
        %v1240 = vstv %s1239
        %v1241 = vmul.f32 %v1044, %v1240
        %v1242 = vmul.f32 %v1045, %v1240
        %1245 = vrot.lane.b32.xlu0 %v1241, 92
        %v1246 = vpop.permute.xlu0 %1245
        %1247 = vrot.lane.b32.xlu0 %v1242, 92
        %v1248 = vpop.permute.xlu0 %1247
        %v1251 = vadd.f32 %v1237, %v1246
        %v1252 = vadd.f32 %v1238, %v1248
        %s1253 = sld [smem:[#allocation8 + $0x1b]]
        %v1254 = vstv %s1253
        %v1255 = vmul.f32 %v1044, %v1254
        %v1256 = vmul.f32 %v1045, %v1254
        %1259 = vrot.lane.b32.xlu0 %v1255, 74
        %v1260 = vpop.permute.xlu0 %1259
        %1261 = vrot.lane.b32.xlu0 %v1256, 74
        %v1262 = vpop.permute.xlu0 %1261
        %v1265 = vadd.f32 %v1251, %v1260
        %v1266 = vadd.f32 %v1252, %v1262
        %s1267 = sld [smem:[#allocation9 + $0x3]]
        %v1268 = vstv %s1267
        %v1269 = vadd.f32 %v1265, %v1268
        %v1270 = vadd.f32 %v1266, %v1268
        %1273 = vrot.lane.b32.xlu0 %v1269, 48
        %v1274 = vpop.permute.xlu0 %1273
        %1275 = vrot.lane.b32.xlu0 %v1270, 48
        %v1276 = vpop.permute.xlu0 %1275
        %vm1279 = vcmask 523648
        %1280 = vst.msk [vmem:[%s330] sm:$0xff] %vm1279, %v1274
        %1281 = vst.msk [vmem:[%s330 + $0x8] sm:$0xff] %vm1279, %v1276
        %s1282 = sld [smem:[#allocation8 + $0x4]]
        %v1283 = vstv %s1282
        %v1284 = vmul.f32 %v1044, %v1283
        %v1285 = vmul.f32 %v1045, %v1283
        %s1286 = sld [smem:[#allocation8 + $0xc]]
        %v1287 = vstv %s1286
        %v1288 = vmul.f32 %v1044, %v1287
        %v1289 = vmul.f32 %v1045, %v1287
        %1292 = vrot.lane.b32.xlu0 %v1288, 110
        %v1293 = vpop.permute.xlu0 %1292
        %1294 = vrot.lane.b32.xlu0 %v1289, 110
        %v1295 = vpop.permute.xlu0 %1294
        %v1298 = vadd.f32 %v1284, %v1293
        %v1299 = vadd.f32 %v1285, %v1295
        %s1300 = sld [smem:[#allocation8 + $0x14]]
        %v1301 = vstv %s1300
        %v1302 = vmul.f32 %v1044, %v1301
        %v1303 = vmul.f32 %v1045, %v1301
        %1306 = vrot.lane.b32.xlu0 %v1302, 92
        %v1307 = vpop.permute.xlu0 %1306
        %1308 = vrot.lane.b32.xlu0 %v1303, 92
        %v1309 = vpop.permute.xlu0 %1308
        %v1312 = vadd.f32 %v1298, %v1307
        %v1313 = vadd.f32 %v1299, %v1309
        %s1314 = sld [smem:[#allocation8 + $0x1c]]
        %v1315 = vstv %s1314
        %v1316 = vmul.f32 %v1044, %v1315
        %v1317 = vmul.f32 %v1045, %v1315
        %1320 = vrot.lane.b32.xlu0 %v1316, 74
        %v1321 = vpop.permute.xlu0 %1320
        %1322 = vrot.lane.b32.xlu0 %v1317, 74
        %v1323 = vpop.permute.xlu0 %1322
        %v1326 = vadd.f32 %v1312, %v1321
        %v1327 = vadd.f32 %v1313, %v1323
        %s1328 = sld [smem:[#allocation9 + $0x4]]
        %v1329 = vstv %s1328
        %v1330 = vadd.f32 %v1326, %v1329
        %v1331 = vadd.f32 %v1327, %v1329
        %1334 = vrot.lane.b32.xlu0 %v1330, 64
        %v1335 = vpop.permute.xlu0 %1334
        %1336 = vrot.lane.b32.xlu0 %v1331, 64
        %v1337 = vpop.permute.xlu0 %1336
        %vm1340 = vcmask 654848
        %1341 = vst.msk [vmem:[%s330] sm:$0xff] %vm1340, %v1335
        %1342 = vst.msk [vmem:[%s330 + $0x8] sm:$0xff] %vm1340, %v1337
        %s1343 = sld [smem:[#allocation8 + $0x5]]
        %v1344 = vstv %s1343
        %v1345 = vmul.f32 %v1044, %v1344
        %v1346 = vmul.f32 %v1045, %v1344
        %s1347 = sld [smem:[#allocation8 + $0xd]]
        %v1348 = vstv %s1347
        %v1349 = vmul.f32 %v1044, %v1348
        %v1350 = vmul.f32 %v1045, %v1348
        %1353 = vrot.lane.b32.xlu0 %v1349, 110
        %v1354 = vpop.permute.xlu0 %1353
        %1355 = vrot.lane.b32.xlu0 %v1350, 110
        %v1356 = vpop.permute.xlu0 %1355
        %v1359 = vadd.f32 %v1345, %v1354
        %v1360 = vadd.f32 %v1346, %v1356
        %s1361 = sld [smem:[#allocation8 + $0x15]]
        %v1362 = vstv %s1361
        %v1363 = vmul.f32 %v1044, %v1362
        %v1364 = vmul.f32 %v1045, %v1362
        %1367 = vrot.lane.b32.xlu0 %v1363, 92
        %v1368 = vpop.permute.xlu0 %1367
        %1369 = vrot.lane.b32.xlu0 %v1364, 92
        %v1370 = vpop.permute.xlu0 %1369
        %v1373 = vadd.f32 %v1359, %v1368
        %v1374 = vadd.f32 %v1360, %v1370
        %s1375 = sld [smem:[#allocation8 + $0x1d]]
        %v1376 = vstv %s1375
        %v1377 = vmul.f32 %v1044, %v1376
        %v1378 = vmul.f32 %v1045, %v1376
        %1381 = vrot.lane.b32.xlu0 %v1377, 74
        %v1382 = vpop.permute.xlu0 %1381
        %1383 = vrot.lane.b32.xlu0 %v1378, 74
        %v1384 = vpop.permute.xlu0 %1383
        %v1387 = vadd.f32 %v1373, %v1382
        %v1388 = vadd.f32 %v1374, %v1384
        %s1389 = sld [smem:[#allocation9 + $0x5]]
        %v1390 = vstv %s1389
        %v1391 = vadd.f32 %v1387, %v1390
        %v1392 = vadd.f32 %v1388, %v1390
        %1395 = vrot.lane.b32.xlu0 %v1391, 80
        %v1396 = vpop.permute.xlu0 %1395
        %1397 = vrot.lane.b32.xlu0 %v1392, 80
        %v1398 = vpop.permute.xlu0 %1397
        %vm1401 = vcmask 786048
        %1402 = vst.msk [vmem:[%s330] sm:$0xff] %vm1401, %v1396
        %1403 = vst.msk [vmem:[%s330 + $0x8] sm:$0xff] %vm1401, %v1398
        %s1404 = sld [smem:[#allocation8 + $0x6]]
        %v1405 = vstv %s1404
        %v1406 = vmul.f32 %v1044, %v1405
        %v1407 = vmul.f32 %v1045, %v1405
        %s1408 = sld [smem:[#allocation8 + $0xe]]
        %v1409 = vstv %s1408
        %v1410 = vmul.f32 %v1044, %v1409
        %v1411 = vmul.f32 %v1045, %v1409
        %1414 = vrot.lane.b32.xlu0 %v1410, 110
        %v1415 = vpop.permute.xlu0 %1414
        %1416 = vrot.lane.b32.xlu0 %v1411, 110
        %v1417 = vpop.permute.xlu0 %1416
        %v1420 = vadd.f32 %v1406, %v1415
        %v1421 = vadd.f32 %v1407, %v1417
        %s1422 = sld [smem:[#allocation8 + $0x16]]
        %v1423 = vstv %s1422
        %v1424 = vmul.f32 %v1044, %v1423
        %v1425 = vmul.f32 %v1045, %v1423
        %1428 = vrot.lane.b32.xlu0 %v1424, 92
        %v1429 = vpop.permute.xlu0 %1428
        %1430 = vrot.lane.b32.xlu0 %v1425, 92
        %v1431 = vpop.permute.xlu0 %1430
        %v1434 = vadd.f32 %v1420, %v1429
        %v1435 = vadd.f32 %v1421, %v1431
        %s1436 = sld [smem:[#allocation8 + $0x1e]]
        %v1437 = vstv %s1436
        %v1438 = vmul.f32 %v1044, %v1437
        %v1439 = vmul.f32 %v1045, %v1437
        %1442 = vrot.lane.b32.xlu0 %v1438, 74
        %v1443 = vpop.permute.xlu0 %1442
        %1444 = vrot.lane.b32.xlu0 %v1439, 74
        %v1445 = vpop.permute.xlu0 %1444
        %v1448 = vadd.f32 %v1434, %v1443
        %v1449 = vadd.f32 %v1435, %v1445
        %s1450 = sld [smem:[#allocation9 + $0x6]]
        %v1451 = vstv %s1450
        %v1452 = vadd.f32 %v1448, %v1451
        %v1453 = vadd.f32 %v1449, %v1451
        %1456 = vrot.lane.b32.xlu0 %v1452, 96
        %v1457 = vpop.permute.xlu0 %1456
        %1458 = vrot.lane.b32.xlu0 %v1453, 96
        %v1459 = vpop.permute.xlu0 %1458
        %vm1462 = vcmask 917248
        %1463 = vst.msk [vmem:[%s330] sm:$0xff] %vm1462, %v1457
        %1464 = vst.msk [vmem:[%s330 + $0x8] sm:$0xff] %vm1462, %v1459
        %s1465 = sld [smem:[#allocation8 + $0x7]]
        %v1466 = vstv %s1465
        %v1467 = vmul.f32 %v1044, %v1466
        %v1468 = vmul.f32 %v1045, %v1466
        %s1469 = sld [smem:[#allocation8 + $0xf]]
        %v1470 = vstv %s1469
        %v1471 = vmul.f32 %v1044, %v1470
        %v1472 = vmul.f32 %v1045, %v1470
        %1475 = vrot.lane.b32.xlu0 %v1471, 110
        %v1476 = vpop.permute.xlu0 %1475
        %1477 = vrot.lane.b32.xlu0 %v1472, 110
        %v1478 = vpop.permute.xlu0 %1477
        %v1481 = vadd.f32 %v1467, %v1476
        %v1482 = vadd.f32 %v1468, %v1478
        %s1483 = sld [smem:[#allocation8 + $0x17]]
        %v1484 = vstv %s1483
        %v1485 = vmul.f32 %v1044, %v1484
        %v1486 = vmul.f32 %v1045, %v1484
        %1489 = vrot.lane.b32.xlu0 %v1485, 92
        %v1490 = vpop.permute.xlu0 %1489
        %1491 = vrot.lane.b32.xlu0 %v1486, 92
        %v1492 = vpop.permute.xlu0 %1491
        %v1495 = vadd.f32 %v1481, %v1490
        %v1496 = vadd.f32 %v1482, %v1492
        %s1497 = sld [smem:[#allocation8 + $0x1f]]
        %v1498 = vstv %s1497
        %v1499 = vmul.f32 %v1044, %v1498
        %v1500 = vmul.f32 %v1045, %v1498
        %1503 = vrot.lane.b32.xlu0 %v1499, 74
        %v1504 = vpop.permute.xlu0 %1503
        %1505 = vrot.lane.b32.xlu0 %v1500, 74
        %v1506 = vpop.permute.xlu0 %1505
        %v1509 = vadd.f32 %v1495, %v1504
        %v1510 = vadd.f32 %v1496, %v1506
        %s1511 = sld [smem:[#allocation9 + $0x7]]
        %v1512 = vstv %s1511
        %v1513 = vadd.f32 %v1509, %v1512
        %v1514 = vadd.f32 %v1510, %v1512
        %1517 = vrot.lane.b32.xlu0 %v1513, 112
        %v1518 = vpop.permute.xlu0 %1517
        %1519 = vrot.lane.b32.xlu0 %v1514, 112
        %v1520 = vpop.permute.xlu0 %1519
        %vm1523 = vcmask 1048448
        %1524 = vst.msk [vmem:[%s330] sm:$0xff] %vm1523, %v1518
        %1525 = vst.msk [vmem:[%s330 + $0x8] sm:$0xff] %vm1523, %v1520
        %p1526 = scmp.lt.s32.totalorder %s21, 1
        %s1527 = scalar_select %p1526, %s21, 1
        %s1528 = smul.addr %s1527, 2
        %s1529 = smul.addr %s1528, 8
        %s1530 = scalar_lea.vmem %s7, %s1529
        // Predicated region
        $region65: #{sepconv_forward.1} parent=47 // pred_check
          %p1531 = pneg %p191
        $region66: #{sepconv_forward.1} parent=47 // pred_check_branch
          %1533 = sbr.rel (%p1531) target = $region68
        $region67: #{sepconv_forward.1} parent=47 // pred_region
          _
        $region68: #{sepconv_forward.1} parent=47 // pred_fallthru
          _
      $region48: #{sepconv_forward.1} parent=5 // pred_fallthru
        _
      %p1534 = scmp.le.s32.totalorder 2, %s16
      // Predicated region
      $region69: #{sepconv_forward.1} parent=5 // pred_check
        %p1535 = pneg %p1534
      $region70: #{sepconv_forward.1} parent=5 // pred_check_branch
        %1537 = sbr.rel (%p1535) target = $region72
      $region71: #{sepconv_forward.1} parent=5 // pred_region
        %s1538 = ssub.s32 %s16, 2
        // Predicated region
        $region73: #{sepconv_forward.1} parent=71 // pred_check
          %p1539 = pneg %p197
        $region74: #{sepconv_forward.1} parent=71 // pred_check_branch
          %1541 = sbr.rel (%p1539) target = $region76
        $region75: #{sepconv_forward.1} parent=71 // pred_region
          %p1542 = scmp.lt.s32.totalorder %s22, 1
          %s1543 = scalar_select %p1542, %s22, 1
          %s1544 = smul.addr %s1543, 2
          %s1545 = smul.addr %s1544, 8
          %s1546 = scalar_lea.vmem %s7, %s1545
        $region76: #{sepconv_forward.1} parent=71 // pred_fallthru
          _
      $region72: #{sepconv_forward.1} parent=5 // pred_fallthru
        _
    $region6: #{sepconv_forward.1} parent=1 // loop_footer
      %s20 = sadd.s32 1, %s16
    $region7: #{sepconv_forward.1} parent=1 // loop_footer_branch
      %15 = sbr.rel target = $region3
    $region8: #{sepconv_forward.1} parent=1 // loop_exit
      _
    %1547 = vsyncpa [#allocation5], 1
    %s1548 = scalar_lea.sflag [#allocation5], 1
    %1549 = vsyncpa %s1548, 1
    %1550 = vsyncpa [#allocation7], 1
    %1551 = vsyncpa [#allocation10], 1

</llo_original>
